<compile_context>
chip_gen: v6e
topology: v6e:2x2x1
jax: 0.10.0
libtpu: 0.0.40
codegen_flags: <defaults>
</compile_context>

<pallas_src>
import functools

import numpy as np

import jax
import jax.numpy as jnp
from jax import lax
from jax.experimental import pallas as pl
from jax.experimental.pallas import tpu as pltpu

EPS = 1e-5  # nn.InstanceNorm2d default eps
_TAPS = tuple((dh, dw) for dh in (-1, 0, 1) for dw in (-1, 0, 1))  # (kh-1, kw-1)


def residual_block_kernel(masks_ref, x_ref, w1_ref, w2_ref, o_ref, *,
                          H, W, Nb, C_out):
    """One grid step: Nb images, full residual block.

    masks_ref: (8, Nb*HW) f32, 1.0 where the shifted tap is in-bounds.
    x_ref:     (Nb, Cp, HW) input dtype.
    w*_ref:    (Cp, 9*Cp) f32 stacked conv weights [co, tap*Cp + ci].
    o_ref:     (Nb, C_out, HW) input dtype.
    """
    HW = H * W
    NbHW = Nb * HW
    Cp = x_ref.shape[1]

    # Fold the batch block onto lanes: (Cp, Nb*HW) f32 slab (cast in-kernel).
    if Nb == 1:
        x = x_ref[0].astype(jnp.float32)
    else:
        x = jnp.concatenate(
            [x_ref[i].astype(jnp.float32) for i in range(Nb)], axis=1)

    masks = masks_ref[...]                          # (8, Nb*HW)

    def stacked_taps(h):
        # Build the (9*Cp, Nb*HW) stacked-tap matrix: tap t occupies sublane
        # rows [t*Cp, (t+1)*Cp).  out-of-image positions are zeroed by masks.
        pieces = []
        m = 0
        for dh, dw in _TAPS:
            if dh == 0 and dw == 0:                 # center tap: no shift/mask
                pieces.append(h)
                continue
            shift = (-(dh * W + dw)) % NbHW         # out[p] = in[p + dh*W + dw]
            pieces.append(pltpu.roll(h, shift=shift, axis=1) * masks[m:m + 1, :])
            m += 1
        return jnp.concatenate(pieces, axis=0)

    inv_hw = jnp.float32(1.0 / HW)

    def conv_instance_norm(h, w_ref):
        # One deep MXU matmul per conv: (Cp, 9*Cp) @ (9*Cp, Nb*HW).
        acc = jnp.dot(w_ref[...], stacked_taps(h),
                      preferred_element_type=jnp.float32,
                      precision=lax.Precision.HIGHEST)
        # Per-image InstanceNorm, fused single-pass stats (biased variance).
        segs = []
        for i in range(Nb):
            seg = acc[:, i * HW:(i + 1) * HW]
            s = jnp.sum(seg, axis=-1, keepdims=True)
            ss = jnp.sum(seg * seg, axis=-1, keepdims=True)
            mean = s * inv_hw
            var = ss * inv_hw - mean * mean
            segs.append((seg - mean) * lax.rsqrt(var + EPS))
        return segs[0] if Nb == 1 else jnp.concatenate(segs, axis=1)

    h1 = jnp.maximum(conv_instance_norm(x, w1_ref), 0.0)
    h2 = conv_instance_norm(h1, w2_ref)
    y = x + h2                                      # residual, (Cp, Nb*HW)

    for i in range(Nb):                             # write unpadded channels
        o_ref[i] = y[:C_out, i * HW:(i + 1) * HW].astype(o_ref.dtype)


def _round_up(v, m):
    return (v + m - 1) // m * m


def _pick_nb(N):
    # Batch several images per grid step to amortize per-step overhead, but
    # keep >= 2 grid steps when possible so both v7x TensorCores get work.
    target = max(1, min(8, N // 2))
    for nb in range(target, 0, -1):
        if N % nb == 0:
            return nb
    return 1


def _boundary_masks(H, W, Nb):
    # Compile-time constants of (H, W): hoisted out of the kernel entirely.
    q = np.arange(H * W)
    row, col = q // W, q % W
    ms = []
    for dh, dw in _TAPS:
        if dh == 0 and dw == 0:
            continue
        m = np.ones(H * W, dtype=bool)
        if dw == 1:
            m &= col < W - 1
        elif dw == -1:
            m &= col >= 1
        if dh == 1:
            m &= row < H - 1
        elif dh == -1:
            m &= row >= 1
        ms.append(m)
    masks = np.stack(ms).astype(np.float32)         # (8, HW)
    return np.tile(masks, (1, Nb))                  # (8, Nb*HW)


def _prep_w(w, C, Cp):
    # (co, ci, kh, kw) -> (co, kh, kw, ci) -> (co, 9, ci) -> pad -> (Cp, 9*Cp)
    # so that W_stacked[co, t*Cp + ci] = w[co, ci, kh, kw] with t = kh*3 + kw.
    wt = jnp.transpose(w.astype(jnp.float32), (0, 2, 3, 1)).reshape(C, 9, C)
    wt = jnp.pad(wt, ((0, Cp - C), (0, 0), (0, Cp - C)))
    return wt.reshape(Cp, 9 * Cp)


@jax.jit
def residual_block(x, w1, b1, w2, b2):
    # Biases feeding a non-affine InstanceNorm are exactly cancelled by its
    # mean subtraction, so they never reach the kernel.
    del b1, b2
    N, C, H, W = x.shape
    HW = H * W
    Cp = _round_up(max(C, 8), 8)
    Nb = _pick_nb(N)
    NbHW = Nb * HW

    xr = x.reshape(N, C, HW)                        # free (trailing-dim reshape)
    if Cp != C:                                     # tiny original-dtype pad
        xr = jnp.pad(xr, ((0, 0), (0, Cp - C), (0, 0)))

    masks = jnp.asarray(_boundary_masks(H, W, Nb))  # (8, Nb*HW) f32 constant
    w1s = _prep_w(w1, C, Cp)
    w2s = _prep_w(w2, C, Cp)

    kernel = functools.partial(residual_block_kernel,
                               H=H, W=W, Nb=Nb, C_out=C)
    out = pl.pallas_call(
        kernel,
        out_shape=jax.ShapeDtypeStruct((N, C, HW), x.dtype),
        grid=(N // Nb,),
        in_specs=[
            pl.BlockSpec((8, NbHW), lambda n: (0, 0)),        # boundary masks
            pl.BlockSpec((Nb, Cp, HW), lambda n: (n, 0, 0)),  # Nb images/step
            pl.BlockSpec((Cp, 9 * Cp), lambda n: (0, 0)),     # conv1 weights
            pl.BlockSpec((Cp, 9 * Cp), lambda n: (0, 0)),     # conv2 weights
        ],
        out_specs=pl.BlockSpec((Nb, C, HW), lambda n: (n, 0, 0)),
        compiler_params=pltpu.CompilerParams(
            dimension_semantics=("parallel",)),               # v7x megacore
    )(masks, xr, w1s, w2s)

    return out.reshape(N, C, H, W)                  # free (trailing-dim reshape)


def reference_forward(x, w1, b1, w2, b2):
    """Pure-JAX reference matching the PyTorch module semantics."""
    def conv(h, w, b):
        y = lax.conv_general_dilated(
            h, w, window_strides=(1, 1), padding="SAME",
            dimension_numbers=("NCHW", "OIHW", "NCHW"),
            precision=lax.Precision.HIGHEST)
        return y + b[None, :, None, None]

    def inorm(y):
        m = y.mean(axis=(2, 3), keepdims=True)
        v = ((y - m) ** 2).mean(axis=(2, 3), keepdims=True)
        return (y - m) / jnp.sqrt(v + EPS)

    h = jax.nn.relu(inorm(conv(x, w1, b1)))
    h = inorm(conv(h, w2, b2))
    return x + h


if __name__ == "__main__":
    def run_case(N, C, H, W):
        key = jax.random.PRNGKey(0)
        kx, kw1, kb1, kw2, kb2 = jax.random.split(key, 5)
        x = jax.random.normal(kx, (N, C, H, W), jnp.float32)
        # Conv2d weight layout: (out_ch, in_ch, kH, kW); bias: (out_ch,)
        w1 = 0.2 * jax.random.normal(kw1, (C, C, 3, 3), jnp.float32)
        b1 = 0.1 * jax.random.normal(kb1, (C,), jnp.float32)
        w2 = 0.2 * jax.random.normal(kw2, (C, C, 3, 3), jnp.float32)
        b2 = 0.1 * jax.random.normal(kb2, (C,), jnp.float32)

        out = jax.block_until_ready(residual_block(x, w1, b1, w2, b2))
        ref = reference_forward(x, w1, b1, w2, b2)
        assert out.shape == (N, C, H, W)
        assert jnp.allclose(out, ref, atol=1e-3, rtol=1e-3), \
            f"mismatch vs reference at shape {(N, C, H, W)}"

    run_case(2, 4, 16, 16)   # spec shape: Nb=1, 2 grid steps, padded channels
    run_case(4, 8, 16, 16)   # exercises batch folding (Nb=2) and C % 8 == 0
    print("KERNEL_OK")
</pallas_src>

<mosaic_0001>
module attributes {stable_mosaic.version = 11 : i64} {
  func.func @residual_block_kernel(%arg0: i32, %arg1: memref<8x256xf32, #tpu.memory_space<vmem>>, %arg2: memref<1x8x256xf32, #tpu.memory_space<vmem>>, %arg3: memref<8x72xf32, #tpu.memory_space<vmem>>, %arg4: memref<8x72xf32, #tpu.memory_space<vmem>>, %arg5: memref<1x4x256xf32, #tpu.memory_space<vmem>>) attributes {dimension_semantics = [#tpu.dimension_semantics<parallel>], iteration_bounds = array<i64: 2>, scalar_prefetch = 0 : i64, scratch_operands = 0 : i64, tpu.core_type = #tpu.core_type<tc>, window_params = [{pipeline_mode = #tpu.pipeline_mode<synchronous>, transform_indices = @transform_0, window_bounds = array<i64: 8, 256>}, {transform_indices = @transform_1, window_bounds = array<i64: 1, 8, 256>}, {pipeline_mode = #tpu.pipeline_mode<synchronous>, transform_indices = @transform_2, window_bounds = array<i64: 8, 72>}, {pipeline_mode = #tpu.pipeline_mode<synchronous>, transform_indices = @transform_3, window_bounds = array<i64: 8, 72>}, {transform_indices = @transform_4, window_bounds = array<i64: 1, 4, 256>}]} {
    %c0 = arith.constant 0 : index
    %c0_0 = arith.constant 0 : index
    %c0_1 = arith.constant 0 : index
    %0 = vector.load %arg2[%c0, %c0_0, %c0_1] : memref<1x8x256xf32, #tpu.memory_space<vmem>>, vector<1x8x256xf32>
    %1 = vector.shape_cast %0 : vector<1x8x256xf32> to vector<8x256xf32>
    %c0_2 = arith.constant 0 : index
    %c0_3 = arith.constant 0 : index
    %2 = vector.load %arg1[%c0_2, %c0_3] : memref<8x256xf32, #tpu.memory_space<vmem>>, vector<8x256xf32>
    %c0_4 = arith.constant 0 : index
    %c0_5 = arith.constant 0 : index
    %3 = vector.load %arg3[%c0_4, %c0_5] : memref<8x72xf32, #tpu.memory_space<vmem>>, vector<8x72xf32>
    %c17_i32 = arith.constant 17 : i32
    %4 = tpu.dynamic_rotate %1 by %c17_i32 dim 1 : vector<8x256xf32>, i32 -> vector<8x256xf32>
    %5 = vector.extract_strided_slice %2 {offsets = [0, 0], sizes = [1, 256], strides = [1, 1]} : vector<8x256xf32> to vector<1x256xf32>
    %6 = vector.broadcast %5 : vector<1x256xf32> to vector<8x256xf32>
    %7 = arith.mulf %4, %6 : vector<8x256xf32>
    %c16_i32 = arith.constant 16 : i32
    %8 = tpu.dynamic_rotate %1 by %c16_i32 dim 1 : vector<8x256xf32>, i32 -> vector<8x256xf32>
    %9 = vector.extract_strided_slice %2 {offsets = [1, 0], sizes = [1, 256], strides = [1, 1]} : vector<8x256xf32> to vector<1x256xf32>
    %10 = vector.broadcast %9 : vector<1x256xf32> to vector<8x256xf32>
    %11 = arith.mulf %8, %10 : vector<8x256xf32>
    %c15_i32 = arith.constant 15 : i32
    %12 = tpu.dynamic_rotate %1 by %c15_i32 dim 1 : vector<8x256xf32>, i32 -> vector<8x256xf32>
    %13 = vector.extract_strided_slice %2 {offsets = [2, 0], sizes = [1, 256], strides = [1, 1]} : vector<8x256xf32> to vector<1x256xf32>
    %14 = vector.broadcast %13 : vector<1x256xf32> to vector<8x256xf32>
    %15 = arith.mulf %12, %14 : vector<8x256xf32>
    %c1_i32 = arith.constant 1 : i32
    %16 = tpu.dynamic_rotate %1 by %c1_i32 dim 1 : vector<8x256xf32>, i32 -> vector<8x256xf32>
    %17 = vector.extract_strided_slice %2 {offsets = [3, 0], sizes = [1, 256], strides = [1, 1]} : vector<8x256xf32> to vector<1x256xf32>
    %18 = vector.broadcast %17 : vector<1x256xf32> to vector<8x256xf32>
    %19 = arith.mulf %16, %18 : vector<8x256xf32>
    %c255_i32 = arith.constant 255 : i32
    %20 = tpu.dynamic_rotate %1 by %c255_i32 dim 1 : vector<8x256xf32>, i32 -> vector<8x256xf32>
    %21 = vector.extract_strided_slice %2 {offsets = [4, 0], sizes = [1, 256], strides = [1, 1]} : vector<8x256xf32> to vector<1x256xf32>
    %22 = vector.broadcast %21 : vector<1x256xf32> to vector<8x256xf32>
    %23 = arith.mulf %20, %22 : vector<8x256xf32>
    %c241_i32 = arith.constant 241 : i32
    %24 = tpu.dynamic_rotate %1 by %c241_i32 dim 1 : vector<8x256xf32>, i32 -> vector<8x256xf32>
    %25 = vector.extract_strided_slice %2 {offsets = [5, 0], sizes = [1, 256], strides = [1, 1]} : vector<8x256xf32> to vector<1x256xf32>
    %26 = vector.broadcast %25 : vector<1x256xf32> to vector<8x256xf32>
    %27 = arith.mulf %24, %26 : vector<8x256xf32>
    %c240_i32 = arith.constant 240 : i32
    %28 = tpu.dynamic_rotate %1 by %c240_i32 dim 1 : vector<8x256xf32>, i32 -> vector<8x256xf32>
    %29 = vector.extract_strided_slice %2 {offsets = [6, 0], sizes = [1, 256], strides = [1, 1]} : vector<8x256xf32> to vector<1x256xf32>
    %30 = vector.broadcast %29 : vector<1x256xf32> to vector<8x256xf32>
    %31 = arith.mulf %28, %30 : vector<8x256xf32>
    %c239_i32 = arith.constant 239 : i32
    %32 = tpu.dynamic_rotate %1 by %c239_i32 dim 1 : vector<8x256xf32>, i32 -> vector<8x256xf32>
    %33 = vector.extract_strided_slice %2 {offsets = [7, 0], sizes = [1, 256], strides = [1, 1]} : vector<8x256xf32> to vector<1x256xf32>
    %34 = vector.broadcast %33 : vector<1x256xf32> to vector<8x256xf32>
    %35 = arith.mulf %32, %34 : vector<8x256xf32>
    %36 = tpu.concatenate %7, %11, %15, %19, %1, %23, %27, %31, %35 in 0 : vector<8x256xf32>, vector<8x256xf32>, vector<8x256xf32>, vector<8x256xf32>, vector<8x256xf32>, vector<8x256xf32>, vector<8x256xf32>, vector<8x256xf32>, vector<8x256xf32> -> vector<72x256xf32>
    %cst = arith.constant dense<0.000000e+00> : vector<8x256xf32>
    %37 = tpu.matmul %3, %36, %cst {dimension_numbers = #tpu.dot_dimension_numbers<[1], [0], [0], [1], [0, 0, 1, 1], [], []>, precision = #tpu.contract_precision<fp32>} : vector<8x72xf32>, vector<72x256xf32>, vector<8x256xf32> -> vector<8x256xf32>
    %cst_6 = arith.constant dense<0.000000e+00> : vector<8xf32>
    %38 = vector.multi_reduction <add>, %37, %cst_6 [1] : vector<8x256xf32> to vector<8xf32>
    %39 = vector.shape_cast %38 : vector<8xf32> to vector<8x1xf32>
    %40 = arith.mulf %37, %37 : vector<8x256xf32>
    %cst_7 = arith.constant dense<0.000000e+00> : vector<8xf32>
    %41 = vector.multi_reduction <add>, %40, %cst_7 [1] : vector<8x256xf32> to vector<8xf32>
    %42 = vector.shape_cast %41 : vector<8xf32> to vector<8x1xf32>
    %cst_8 = arith.constant 3.906250e-03 : f32
    %43 = vector.broadcast %cst_8 : f32 to vector<8x1xf32>
    %44 = arith.mulf %39, %43 : vector<8x1xf32>
    %cst_9 = arith.constant 3.906250e-03 : f32
    %45 = vector.broadcast %cst_9 : f32 to vector<8x1xf32>
    %46 = arith.mulf %42, %45 : vector<8x1xf32>
    %47 = arith.mulf %44, %44 : vector<8x1xf32>
    %48 = arith.subf %46, %47 : vector<8x1xf32>
    %49 = vector.broadcast %44 : vector<8x1xf32> to vector<8x256xf32>
    %50 = arith.subf %37, %49 : vector<8x256xf32>
    %cst_10 = arith.constant 9.99999974E-6 : f32
    %51 = vector.broadcast %cst_10 : f32 to vector<8x1xf32>
    %52 = arith.addf %48, %51 : vector<8x1xf32>
    %53 = math.rsqrt %52 : vector<8x1xf32>
    %54 = vector.broadcast %53 : vector<8x1xf32> to vector<8x256xf32>
    %55 = arith.mulf %50, %54 : vector<8x256xf32>
    %cst_11 = arith.constant 0.000000e+00 : f32
    %56 = vector.broadcast %cst_11 : f32 to vector<8x256xf32>
    %57 = arith.maximumf %55, %56 : vector<8x256xf32>
    %c0_12 = arith.constant 0 : index
    %c0_13 = arith.constant 0 : index
    %58 = vector.load %arg4[%c0_12, %c0_13] : memref<8x72xf32, #tpu.memory_space<vmem>>, vector<8x72xf32>
    %c17_i32_14 = arith.constant 17 : i32
    %59 = tpu.dynamic_rotate %57 by %c17_i32_14 dim 1 : vector<8x256xf32>, i32 -> vector<8x256xf32>
    %60 = vector.extract_strided_slice %2 {offsets = [0, 0], sizes = [1, 256], strides = [1, 1]} : vector<8x256xf32> to vector<1x256xf32>
    %61 = vector.broadcast %60 : vector<1x256xf32> to vector<8x256xf32>
    %62 = arith.mulf %59, %61 : vector<8x256xf32>
    %c16_i32_15 = arith.constant 16 : i32
    %63 = tpu.dynamic_rotate %57 by %c16_i32_15 dim 1 : vector<8x256xf32>, i32 -> vector<8x256xf32>
    %64 = vector.extract_strided_slice %2 {offsets = [1, 0], sizes = [1, 256], strides = [1, 1]} : vector<8x256xf32> to vector<1x256xf32>
    %65 = vector.broadcast %64 : vector<1x256xf32> to vector<8x256xf32>
    %66 = arith.mulf %63, %65 : vector<8x256xf32>
    %c15_i32_16 = arith.constant 15 : i32
    %67 = tpu.dynamic_rotate %57 by %c15_i32_16 dim 1 : vector<8x256xf32>, i32 -> vector<8x256xf32>
    %68 = vector.extract_strided_slice %2 {offsets = [2, 0], sizes = [1, 256], strides = [1, 1]} : vector<8x256xf32> to vector<1x256xf32>
    %69 = vector.broadcast %68 : vector<1x256xf32> to vector<8x256xf32>
    %70 = arith.mulf %67, %69 : vector<8x256xf32>
    %c1_i32_17 = arith.constant 1 : i32
    %71 = tpu.dynamic_rotate %57 by %c1_i32_17 dim 1 : vector<8x256xf32>, i32 -> vector<8x256xf32>
    %72 = vector.extract_strided_slice %2 {offsets = [3, 0], sizes = [1, 256], strides = [1, 1]} : vector<8x256xf32> to vector<1x256xf32>
    %73 = vector.broadcast %72 : vector<1x256xf32> to vector<8x256xf32>
    %74 = arith.mulf %71, %73 : vector<8x256xf32>
    %c255_i32_18 = arith.constant 255 : i32
    %75 = tpu.dynamic_rotate %57 by %c255_i32_18 dim 1 : vector<8x256xf32>, i32 -> vector<8x256xf32>
    %76 = vector.extract_strided_slice %2 {offsets = [4, 0], sizes = [1, 256], strides = [1, 1]} : vector<8x256xf32> to vector<1x256xf32>
    %77 = vector.broadcast %76 : vector<1x256xf32> to vector<8x256xf32>
    %78 = arith.mulf %75, %77 : vector<8x256xf32>
    %c241_i32_19 = arith.constant 241 : i32
    %79 = tpu.dynamic_rotate %57 by %c241_i32_19 dim 1 : vector<8x256xf32>, i32 -> vector<8x256xf32>
    %80 = vector.extract_strided_slice %2 {offsets = [5, 0], sizes = [1, 256], strides = [1, 1]} : vector<8x256xf32> to vector<1x256xf32>
    %81 = vector.broadcast %80 : vector<1x256xf32> to vector<8x256xf32>
    %82 = arith.mulf %79, %81 : vector<8x256xf32>
    %c240_i32_20 = arith.constant 240 : i32
    %83 = tpu.dynamic_rotate %57 by %c240_i32_20 dim 1 : vector<8x256xf32>, i32 -> vector<8x256xf32>
    %84 = vector.extract_strided_slice %2 {offsets = [6, 0], sizes = [1, 256], strides = [1, 1]} : vector<8x256xf32> to vector<1x256xf32>
    %85 = vector.broadcast %84 : vector<1x256xf32> to vector<8x256xf32>
    %86 = arith.mulf %83, %85 : vector<8x256xf32>
    %c239_i32_21 = arith.constant 239 : i32
    %87 = tpu.dynamic_rotate %57 by %c239_i32_21 dim 1 : vector<8x256xf32>, i32 -> vector<8x256xf32>
    %88 = vector.extract_strided_slice %2 {offsets = [7, 0], sizes = [1, 256], strides = [1, 1]} : vector<8x256xf32> to vector<1x256xf32>
    %89 = vector.broadcast %88 : vector<1x256xf32> to vector<8x256xf32>
    %90 = arith.mulf %87, %89 : vector<8x256xf32>
    %91 = tpu.concatenate %62, %66, %70, %74, %57, %78, %82, %86, %90 in 0 : vector<8x256xf32>, vector<8x256xf32>, vector<8x256xf32>, vector<8x256xf32>, vector<8x256xf32>, vector<8x256xf32>, vector<8x256xf32>, vector<8x256xf32>, vector<8x256xf32> -> vector<72x256xf32>
    %cst_22 = arith.constant dense<0.000000e+00> : vector<8x256xf32>
    %92 = tpu.matmul %58, %91, %cst_22 {dimension_numbers = #tpu.dot_dimension_numbers<[1], [0], [0], [1], [0, 0, 1, 1], [], []>, precision = #tpu.contract_precision<fp32>} : vector<8x72xf32>, vector<72x256xf32>, vector<8x256xf32> -> vector<8x256xf32>
    %cst_23 = arith.constant dense<0.000000e+00> : vector<8xf32>
    %93 = vector.multi_reduction <add>, %92, %cst_23 [1] : vector<8x256xf32> to vector<8xf32>
    %94 = vector.shape_cast %93 : vector<8xf32> to vector<8x1xf32>
    %95 = arith.mulf %92, %92 : vector<8x256xf32>
    %cst_24 = arith.constant dense<0.000000e+00> : vector<8xf32>
    %96 = vector.multi_reduction <add>, %95, %cst_24 [1] : vector<8x256xf32> to vector<8xf32>
    %97 = vector.shape_cast %96 : vector<8xf32> to vector<8x1xf32>
    %cst_25 = arith.constant 3.906250e-03 : f32
    %98 = vector.broadcast %cst_25 : f32 to vector<8x1xf32>
    %99 = arith.mulf %94, %98 : vector<8x1xf32>
    %cst_26 = arith.constant 3.906250e-03 : f32
    %100 = vector.broadcast %cst_26 : f32 to vector<8x1xf32>
    %101 = arith.mulf %97, %100 : vector<8x1xf32>
    %102 = arith.mulf %99, %99 : vector<8x1xf32>
    %103 = arith.subf %101, %102 : vector<8x1xf32>
    %104 = vector.broadcast %99 : vector<8x1xf32> to vector<8x256xf32>
    %105 = arith.subf %92, %104 : vector<8x256xf32>
    %cst_27 = arith.constant 9.99999974E-6 : f32
    %106 = vector.broadcast %cst_27 : f32 to vector<8x1xf32>
    %107 = arith.addf %103, %106 : vector<8x1xf32>
    %108 = math.rsqrt %107 : vector<8x1xf32>
    %109 = vector.broadcast %108 : vector<8x1xf32> to vector<8x256xf32>
    %110 = arith.mulf %105, %109 : vector<8x256xf32>
    %111 = arith.addf %1, %110 : vector<8x256xf32>
    %112 = vector.extract_strided_slice %111 {offsets = [0, 0], sizes = [4, 256], strides = [1, 1]} : vector<8x256xf32> to vector<4x256xf32>
    %c0_28 = arith.constant 0 : index
    %c0_29 = arith.constant 0 : index
    %c0_30 = arith.constant 0 : index
    %113 = vector.load %arg5[%c0_28, %c0_29, %c0_30] : memref<1x4x256xf32, #tpu.memory_space<vmem>>, vector<1x4x256xf32>
    %114 = vector.shape_cast %113 : vector<1x4x256xf32> to vector<4x256xf32>
    %115 = vector.shape_cast %112 : vector<4x256xf32> to vector<1x4x256xf32>
    tpu.vector_store %arg5[%c0_28, %c0_29, %c0_30], %115 {strides = array<i32>} : memref<1x4x256xf32, #tpu.memory_space<vmem>>, vector<1x4x256xf32>,
    return
  }
  func.func @transform_0(%arg0: i32) -> (i32, i32) {
    %c0_i32 = arith.constant 0 : i32
    %c0_i32_0 = arith.constant 0 : i32
    %c0_i32_1 = arith.constant 0 : i32
    return %c0_i32, %c0_i32_0 : i32, i32
  }
  func.func @transform_1(%arg0: i32) -> (i32, i32, i32) {
    %c0_i32 = arith.constant 0 : i32
    %c0_i32_0 = arith.constant 0 : i32
    %c0_i32_1 = arith.constant 0 : i32
    return %arg0, %c0_i32, %c0_i32_0 : i32, i32, i32
  }
  func.func @transform_2(%arg0: i32) -> (i32, i32) {
    %c0_i32 = arith.constant 0 : i32
    %c0_i32_0 = arith.constant 0 : i32
    %c0_i32_1 = arith.constant 0 : i32
    return %c0_i32, %c0_i32_0 : i32, i32
  }
  func.func @transform_3(%arg0: i32) -> (i32, i32) {
    %c0_i32 = arith.constant 0 : i32
    %c0_i32_0 = arith.constant 0 : i32
    %c0_i32_1 = arith.constant 0 : i32
    return %c0_i32, %c0_i32_0 : i32, i32
  }
  func.func @transform_4(%arg0: i32) -> (i32, i32, i32) {
    %c0_i32 = arith.constant 0 : i32
    %c0_i32_0 = arith.constant 0 : i32
    %c0_i32_1 = arith.constant 0 : i32
    return %arg0, %c0_i32, %c0_i32_0 : i32, i32, i32
  }
}

</mosaic_0001>

<llo_original>
// kernel: residual_block.1
$region0: #{residual_block.1}
  #allocation0 [shape = 'u32[]', space=smem, size = 0x4, offset = 0x4, fixed_abs, tag = 'smem constant byte address 0x4 - core index']
  #allocation1 [shape = 'u32[144,128]{1,0:T(1,128)}', space=vmem, size = 0x12000, scoped, tag = 'internal scratch']
  %s0 = inlined_call_operand.vmem [shape: f32[8,256], index: 0, kind: input, shape index: {}]
  %s1 = inlined_call_operand.vmem [shape: f32[2,8,256], index: 1, kind: input, shape index: {}]
  %s2 = inlined_call_operand.vmem [shape: f32[8,72], index: 2, kind: input, shape index: {}]
  %s3 = inlined_call_operand.vmem [shape: f32[8,72], index: 3, kind: input, shape index: {}]
  %s4 = inlined_call_operand.vmem [shape: f32[2,4,256], index: 4, kind: output, shape index: {}]
  %s5 = sld [smem:[#allocation0]]
  $region49: #{residual_block.1} parent=0
    _
  %s7 = ssub.s32 1, %s5
  %s8 = scalar_select 0, %s7, %s5
  loop: start=0, step=1, limit=4
  $region2: #{residual_block.1} parent=0 // loop_pre_header
    _
  $region3: #{residual_block.1} parent=0 // loop_header
    %s10 = sphi 0, %s14
    %p11 = scmp.ge.s32.totalorder %s10, 4
    %s18 = sphi 0, %s18
    %s20 = sphi 0, %s18
    %s21 = sphi 0, %s20
    %s35 = sphi 0, %s21
    %s41 = sphi 0, %s43
    %s44 = sphi 0, %s41
    %s45 = sphi 0, %s44
    %s61 = sphi 0, %s45
    %s65 = sphi 0, %s65
    %s67 = sphi 0, %s65
    %s68 = sphi 0, %s67
    %s82 = sphi 0, %s68
    %s86 = sphi 0, %s86
    %s88 = sphi 0, %s86
    %s89 = sphi 0, %s88
    %s103 = sphi 0, %s89
    %s109 = sphi 0, %s111
    %s112 = sphi 0, %s109
    %s113 = sphi 0, %s112
    %s129 = sphi 0, %s113
  $region4: #{residual_block.1} parent=0 // loop_header_branch
    %13 = sbr.rel (%p11) target = $region8
  $region5: #{residual_block.1} parent=0 // loop_body
    %s15 = ssub.s32 %s10, 1
    %s16 = ssub.s32 %s10, 2
    %s17 = sadd.s32 %s10, 1
    %s19 = sadd.s32 %s18, 1
    %p22 = scmp.eq.s32.totalorder %s10, 1
    %p23 = scmp.ne.s32.totalorder %s18, %s20
    %p24 = scmp.eq.s32.totalorder %s10, 0
    %p25 = por %p23, %p24
    %p26 = scmp.ne.s32.totalorder %s18, %s20
    %p27 = scmp.eq.s32.totalorder %s15, 1
    %p28 = por %p26, %p27
    %p29 = scmp.ne.s32.totalorder %s20, %s21
    %p30 = scmp.eq.s32.totalorder %s15, 0
    %p31 = por %p29, %p30
    %p32 = scmp.ne.s32.totalorder %s20, %s21
    %p33 = scmp.eq.s32.totalorder %s16, 1
    %p34 = por %p32, %p33
    %p36 = scmp.ne.s32.totalorder %s21, %s35
    %p37 = scmp.eq.s32.totalorder %s16, 0
    %p38 = por %p36, %p37
    %s39 = ssub.s32 %s10, %s17
    %p40 = scmp.eq.s32.totalorder %s39, 0
    %s42 = sadd.s32 %s41, 1
    %s43 = scalar_select %p40, %s41, %s42
    %p46 = pneg %p40
    %p47 = scmp.eq.s32.totalorder %s10, 1
    %p48 = por %p46, %p47
    %p49 = scmp.ne.s32.totalorder %s41, %s44
    %p50 = scmp.eq.s32.totalorder %s10, 0
    %p51 = por %p49, %p50
    %p52 = scmp.ne.s32.totalorder %s41, %s44
    %p53 = scmp.eq.s32.totalorder %s15, 1
    %p54 = por %p52, %p53
    %p55 = scmp.ne.s32.totalorder %s44, %s45
    %p56 = scmp.eq.s32.totalorder %s15, 0
    %p57 = por %p55, %p56
    %p58 = scmp.ne.s32.totalorder %s44, %s45
    %p59 = scmp.eq.s32.totalorder %s16, 1
    %p60 = por %p58, %p59
    %p62 = scmp.ne.s32.totalorder %s45, %s61
    %p63 = scmp.eq.s32.totalorder %s16, 0
    %p64 = por %p62, %p63
    %s66 = sadd.s32 %s65, 1
    %p69 = scmp.eq.s32.totalorder %s10, 1
    %p70 = scmp.ne.s32.totalorder %s65, %s67
    %p71 = scmp.eq.s32.totalorder %s10, 0
    %p72 = por %p70, %p71
    %p73 = scmp.ne.s32.totalorder %s65, %s67
    %p74 = scmp.eq.s32.totalorder %s15, 1
    %p75 = por %p73, %p74
    %p76 = scmp.ne.s32.totalorder %s67, %s68
    %p77 = scmp.eq.s32.totalorder %s15, 0
    %p78 = por %p76, %p77
    %p79 = scmp.ne.s32.totalorder %s67, %s68
    %p80 = scmp.eq.s32.totalorder %s16, 1
    %p81 = por %p79, %p80
    %p83 = scmp.ne.s32.totalorder %s68, %s82
    %p84 = scmp.eq.s32.totalorder %s16, 0
    %p85 = por %p83, %p84
    %s87 = sadd.s32 %s86, 1
    %p90 = scmp.eq.s32.totalorder %s10, 1
    %p91 = scmp.ne.s32.totalorder %s86, %s88
    %p92 = scmp.eq.s32.totalorder %s10, 0
    %p93 = por %p91, %p92
    %p94 = scmp.ne.s32.totalorder %s86, %s88
    %p95 = scmp.eq.s32.totalorder %s15, 1
    %p96 = por %p94, %p95
    %p97 = scmp.ne.s32.totalorder %s88, %s89
    %p98 = scmp.eq.s32.totalorder %s15, 0
    %p99 = por %p97, %p98
    %p100 = scmp.ne.s32.totalorder %s88, %s89
    %p101 = scmp.eq.s32.totalorder %s16, 1
    %p102 = por %p100, %p101
    %p104 = scmp.ne.s32.totalorder %s89, %s103
    %p105 = scmp.eq.s32.totalorder %s16, 0
    %p106 = por %p104, %p105
    %s107 = ssub.s32 %s10, %s17
    %p108 = scmp.eq.s32.totalorder %s107, 0
    %s110 = sadd.s32 %s109, 1
    %s111 = scalar_select %p108, %s109, %s110
    %p114 = pneg %p108
    %p115 = scmp.eq.s32.totalorder %s10, 1
    %p116 = por %p114, %p115
    %p117 = scmp.ne.s32.totalorder %s109, %s112
    %p118 = scmp.eq.s32.totalorder %s10, 0
    %p119 = por %p117, %p118
    %p120 = scmp.ne.s32.totalorder %s109, %s112
    %p121 = scmp.eq.s32.totalorder %s15, 1
    %p122 = por %p120, %p121
    %p123 = scmp.ne.s32.totalorder %s112, %s113
    %p124 = scmp.eq.s32.totalorder %s15, 0
    %p125 = por %p123, %p124
    %p126 = scmp.ne.s32.totalorder %s112, %s113
    %p127 = scmp.eq.s32.totalorder %s16, 1
    %p128 = por %p126, %p127
    %p130 = scmp.ne.s32.totalorder %s113, %s129
    %p131 = scmp.eq.s32.totalorder %s16, 0
    %p132 = por %p130, %p131
    %p133 = scmp.le.s32.totalorder 1, %s10
    %p134 = scmp.lt.s32.totalorder %s10, 3
    %p135 = pnand %p133, %p134
    %p136 = pneg %p135
    // Predicated region
    $region9: #{residual_block.1} parent=5 // pred_check
      _
    $region10: #{residual_block.1} parent=5 // pred_check_branch
      %138 = sbr.rel (%p135) target = $region12
    $region11: #{residual_block.1} parent=5 // pred_region
      %s139 = ssub.s32 %s10, 1
      // Predicated region
      $region13: #{residual_block.1} parent=11 // pred_check
        %p140 = pneg %p31
      $region14: #{residual_block.1} parent=11 // pred_check_branch
        %142 = sbr.rel (%p140) target = $region16
      $region15: #{residual_block.1} parent=11 // pred_region
        _
      $region16: #{residual_block.1} parent=11 // pred_fallthru
        _
      // Predicated region
      $region17: #{residual_block.1} parent=11 // pred_check
        %p143 = pneg %p78
      $region18: #{residual_block.1} parent=11 // pred_check_branch
        %145 = sbr.rel (%p143) target = $region20
      $region19: #{residual_block.1} parent=11 // pred_region
        _
      $region20: #{residual_block.1} parent=11 // pred_fallthru
        _
      // Predicated region
      $region21: #{residual_block.1} parent=11 // pred_check
        %p146 = pneg %p99
      $region22: #{residual_block.1} parent=11 // pred_check_branch
        %148 = sbr.rel (%p146) target = $region24
      $region23: #{residual_block.1} parent=11 // pred_region
        _
      $region24: #{residual_block.1} parent=11 // pred_fallthru
        _
    $region12: #{residual_block.1} parent=5 // pred_fallthru
      _
    %p149 = scmp.lt.s32.totalorder %s10, 2
    // Predicated region
    $region25: #{residual_block.1} parent=5 // pred_check
      %p150 = pneg %p149
    $region26: #{residual_block.1} parent=5 // pred_check_branch
      %152 = sbr.rel (%p150) target = $region28
    $region27: #{residual_block.1} parent=5 // pred_region
      // Predicated region
      $region29: #{residual_block.1} parent=27 // pred_check
        %p153 = pneg %p51
      $region30: #{residual_block.1} parent=27 // pred_check_branch
        %155 = sbr.rel (%p153) target = $region32
      $region31: #{residual_block.1} parent=27 // pred_region
        %p156 = scmp.lt.s32.totalorder %s10, 1
        %s157 = scalar_select %p156, %s10, 1
        %s158 = smul.addr %s157, 2
        %s159 = smul.addr %s158, 8
        %s160 = scalar_lea.vmem %s1, %s159
      $region32: #{residual_block.1} parent=27 // pred_fallthru
        _
    $region28: #{residual_block.1} parent=5 // pred_fallthru
      _
    %p161 = scmp.le.s32.totalorder 1, %s10
    %p162 = scmp.lt.s32.totalorder %s10, 3
    %p163 = pnand %p161, %p162
    %p164 = pneg %p163
    // Predicated region
    $region33: #{residual_block.1} parent=5 // pred_check
      _
    $region34: #{residual_block.1} parent=5 // pred_check_branch
      %166 = sbr.rel (%p163) target = $region36
    $region35: #{residual_block.1} parent=5 // pred_region
      %s167 = ssub.s32 %s10, 1
      %p168 = pneg %p31
      %p169 = pneg %p28
      %p170 = scmp.lt.s32.totalorder %s15, 1
      %s171 = scalar_select %p170, %s15, 1
      %s172 = smul.addr %s171, 2
      %s173 = smul.addr %s172, 8
      %s174 = scalar_lea.vmem %s1, %s173
      %p175 = pneg %p57
      %p176 = pneg %p54
      %p177 = pneg %p78
      %p178 = pneg %p75
      %p179 = pneg %p99
      %p180 = pneg %p96
      %p181 = pneg %p125
      %p182 = pneg %p122
      %p183 = scmp.lt.s32.totalorder %s15, 1
      %s184 = scalar_select %p183, %s15, 1
      %s185 = smul.addr %s184, 2
      %s186 = smul.addr %s185, 4
      %s187 = scalar_lea.vmem %s4, %s186
      %p188 = scmp.lt.s32.totalorder %s15, 1
      %s189 = scalar_select %p188, %s15, 1
      %s190 = smul.addr %s189, 2
      %s191 = smul.addr %s190, 8
      %s192 = scalar_lea.vmem %s1, %s191
      %p193 = scmp.lt.s32.totalorder %s15, 1
      %s194 = scalar_select %p193, %s15, 1
      %s195 = smul.addr %s194, 2
      %s196 = smul.addr %s195, 4
      %s197 = scalar_lea.vmem %s4, %s196
      %v198 = vld [vmem:[%s192] sm:$0xff]
      %v199 = vld [vmem:[%s192 + $0x8] sm:$0xff]
      %v200 = vld [vmem:[%s0] sm:$0xff]
      %v201 = vld [vmem:[%s0 + $0x8] sm:$0xff]
      %v202 = vld [vmem:[%s2] sm:$0xff]
      %203 = vrot.lane.b32.xlu0 %v198, 17
      %v204 = vpop.permute.xlu0 %203
      %205 = vrot.lane.b32.xlu0 %v199, 17
      %v206 = vpop.permute.xlu0 %205
      %v207 = vlaneseq
      %v208 = vand.u32 %v207, 127
      %vm209 = vcmp.lt.s32.totalorder %v208, 17
      %v210 = vsel %vm209, %v204, %v206
      %v211 = vsel %vm209, %v206, %v204
      %v212 = vlaneseq
      %v213 = vshrl.u32 %v212, 7
      %v214 = vsub.s32 0, %v213
      %v215 = vrot.slane %v200, %v214
      %v216 = vlaneseq
      %v217 = vshrl.u32 %v216, 7
      %v218 = vsub.s32 0, %v217
      %v219 = vrot.slane %v201, %v218
      %v220 = vmul.f32 %v211, %v215
      %v221 = vmul.f32 %v210, %v219
      %222 = vrot.lane.b32.xlu0 %v198, 16
      %v223 = vpop.permute.xlu0 %222
      %224 = vrot.lane.b32.xlu0 %v199, 16
      %v225 = vpop.permute.xlu0 %224
      %vm226 = vcmp.lt.s32.totalorder %v208, 16
      %v227 = vsel %vm226, %v223, %v225
      %v228 = vsel %vm226, %v225, %v223
      %v229 = vlaneseq
      %v230 = vshrl.u32 %v229, 7
      %v231 = vsub.s32 1, %v230
      %v232 = vrot.slane %v200, %v231
      %v233 = vlaneseq
      %v234 = vshrl.u32 %v233, 7
      %v235 = vsub.s32 1, %v234
      %v236 = vrot.slane %v201, %v235
      %v237 = vmul.f32 %v228, %v232
      %v238 = vmul.f32 %v227, %v236
      %239 = vrot.lane.b32.xlu0 %v198, 15
      %v240 = vpop.permute.xlu0 %239
      %241 = vrot.lane.b32.xlu0 %v199, 15
      %v242 = vpop.permute.xlu0 %241
      %vm243 = vcmp.lt.s32.totalorder %v208, 15
      %v244 = vsel %vm243, %v240, %v242
      %v245 = vsel %vm243, %v242, %v240
      %v246 = vlaneseq
      %v247 = vshrl.u32 %v246, 7
      %v248 = vsub.s32 2, %v247
      %v249 = vrot.slane %v200, %v248
      %v250 = vlaneseq
      %v251 = vshrl.u32 %v250, 7
      %v252 = vsub.s32 2, %v251
      %v253 = vrot.slane %v201, %v252
      %v254 = vmul.f32 %v245, %v249
      %v255 = vmul.f32 %v244, %v253
      %256 = vrot.lane.b32.xlu0 %v198, 1
      %v257 = vpop.permute.xlu0 %256
      %258 = vrot.lane.b32.xlu0 %v199, 1
      %v259 = vpop.permute.xlu0 %258
      %vm260 = vcmp.lt.s32.totalorder %v208, 1
      %v261 = vsel %vm260, %v257, %v259
      %v262 = vsel %vm260, %v259, %v257
      %v263 = vlaneseq
      %v264 = vshrl.u32 %v263, 7
      %v265 = vsub.s32 3, %v264
      %v266 = vrot.slane %v200, %v265
      %v267 = vlaneseq
      %v268 = vshrl.u32 %v267, 7
      %v269 = vsub.s32 3, %v268
      %v270 = vrot.slane %v201, %v269
      %v271 = vmul.f32 %v262, %v266
      %v272 = vmul.f32 %v261, %v270
      %273 = vrot.lane.b32.xlu0 %v198, 127
      %v274 = vpop.permute.xlu0 %273
      %275 = vrot.lane.b32.xlu0 %v199, 127
      %v276 = vpop.permute.xlu0 %275
      %vm277 = vcmp.lt.s32.totalorder %v208, 127
      %v278 = vsel %vm277, %v274, %v276
      %v279 = vsel %vm277, %v276, %v274
      %v280 = vlaneseq
      %v281 = vshrl.u32 %v280, 7
      %v282 = vsub.s32 4, %v281
      %v283 = vrot.slane %v200, %v282
      %v284 = vlaneseq
      %v285 = vshrl.u32 %v284, 7
      %v286 = vsub.s32 4, %v285
      %v287 = vrot.slane %v201, %v286
      %v288 = vmul.f32 %v278, %v283
      %v289 = vmul.f32 %v279, %v287
      %290 = vrot.lane.b32.xlu0 %v198, 113
      %v291 = vpop.permute.xlu0 %290
      %292 = vrot.lane.b32.xlu0 %v199, 113
      %v293 = vpop.permute.xlu0 %292
      %vm294 = vcmp.lt.s32.totalorder %v208, 113
      %v295 = vsel %vm294, %v291, %v293
      %v296 = vsel %vm294, %v293, %v291
      %v297 = vlaneseq
      %v298 = vshrl.u32 %v297, 7
      %v299 = vsub.s32 5, %v298
      %v300 = vrot.slane %v200, %v299
      %v301 = vlaneseq
      %v302 = vshrl.u32 %v301, 7
      %v303 = vsub.s32 5, %v302
      %v304 = vrot.slane %v201, %v303
      %v305 = vmul.f32 %v295, %v300
      %v306 = vmul.f32 %v296, %v304
      %307 = vrot.lane.b32.xlu0 %v198, 112
      %v308 = vpop.permute.xlu0 %307
      %309 = vrot.lane.b32.xlu0 %v199, 112
      %v310 = vpop.permute.xlu0 %309
      %vm311 = vcmp.lt.s32.totalorder %v208, 112
      %v312 = vsel %vm311, %v308, %v310
      %v313 = vsel %vm311, %v310, %v308
      %v314 = vlaneseq
      %v315 = vshrl.u32 %v314, 7
      %v316 = vsub.s32 6, %v315
      %v317 = vrot.slane %v200, %v316
      %v318 = vlaneseq
      %v319 = vshrl.u32 %v318, 7
      %v320 = vsub.s32 6, %v319
      %v321 = vrot.slane %v201, %v320
      %v322 = vmul.f32 %v312, %v317
      %v323 = vmul.f32 %v313, %v321
      %324 = vrot.lane.b32.xlu0 %v198, 111
      %v325 = vpop.permute.xlu0 %324
      %326 = vrot.lane.b32.xlu0 %v199, 111
      %v327 = vpop.permute.xlu0 %326
      %vm328 = vcmp.lt.s32.totalorder %v208, 111
      %v329 = vsel %vm328, %v325, %v327
      %v330 = vsel %vm328, %v327, %v325
      %v331 = vlaneseq
      %v332 = vshrl.u32 %v331, 7
      %v333 = vsub.s32 7, %v332
      %v334 = vrot.slane %v200, %v333
      %v335 = vlaneseq
      %v336 = vshrl.u32 %v335, 7
      %v337 = vsub.s32 7, %v336
      %v338 = vrot.slane %v201, %v337
      %v339 = vmul.f32 %v329, %v334
      %v340 = vmul.f32 %v330, %v338
      %vm341 = vcmask 588800
      %v343 = vsel %vm341, %v202, 0
      %345 = vmatprep.subr.mxu0 0.0
      %346 = vmatpush1.msra.mxu0 0.0
      %347 = vmatprep.subr.mxu0 0.0
      %348 = vmatpush1.msra.mxu0 0.0
      %349 = vmatprep.subr.mxu0 0.0
      %350 = vmatpush1.msra.mxu0 0.0
      %351 = vmatprep.subr.mxu0 0.0
      %352 = vmatpush1.msra.mxu0 0.0
      %353 = vmatprep.subr.mxu0 0.0
      %354 = vmatpush1.msra.mxu0 0.0
      %355 = vmatprep.subr.mxu0 0.0
      %356 = vmatpush1.msra.mxu0 0.0
      %357 = vmatprep.subr.mxu0 0.0
      %358 = vmatpush1.msra.mxu0 0.0
      %v359 = vand.u32 %v340, 4294901760
      %360 = vmatprep.subr.mxu0 %v359
      %v361 = vand.u32 %v339, 4294901760
      %362 = vmatpush1.msra.mxu0 %v361
      %v363 = vand.u32 %v323, 4294901760
      %364 = vmatprep.subr.mxu0 %v363
      %v365 = vand.u32 %v322, 4294901760
      %366 = vmatpush1.msra.mxu0 %v365
      %v367 = vand.u32 %v306, 4294901760
      %368 = vmatprep.subr.mxu0 %v367
      %v369 = vand.u32 %v305, 4294901760
      %370 = vmatpush1.msra.mxu0 %v369
      %v371 = vand.u32 %v289, 4294901760
      %372 = vmatprep.subr.mxu0 %v371
      %v373 = vand.u32 %v288, 4294901760
      %374 = vmatpush1.msra.mxu0 %v373
      %v375 = vand.u32 %v199, 4294901760
      %376 = vmatprep.subr.mxu0 %v375
      %v377 = vand.u32 %v198, 4294901760
      %378 = vmatpush1.msra.mxu0 %v377
      %v379 = vand.u32 %v272, 4294901760
      %380 = vmatprep.subr.mxu0 %v379
      %v381 = vand.u32 %v271, 4294901760
      %382 = vmatpush1.msra.mxu0 %v381
      %v383 = vand.u32 %v255, 4294901760
      %384 = vmatprep.subr.mxu0 %v383
      %v385 = vand.u32 %v254, 4294901760
      %386 = vmatpush1.msra.mxu0 %v385
      %v387 = vand.u32 %v238, 4294901760
      %388 = vmatprep.subr.mxu0 %v387
      %v389 = vand.u32 %v237, 4294901760
      %390 = vmatpush1.msra.mxu0 %v389
      %v391 = vand.u32 %v221, 4294901760
      %392 = vmatprep.subr.mxu0 %v391
      %v393 = vand.u32 %v220, 4294901760
      %394 = vmatpush1.msra.mxu0 %v393
      %395 = vmatprep.subr.mxu0 0.0
      %396 = vmatpush2.msra.mxu0 0.0
      %397 = vmatprep.subr.mxu0 0.0
      %398 = vmatpush2.msra.mxu0 0.0
      %399 = vmatprep.subr.mxu0 0.0
      %400 = vmatpush2.msra.mxu0 0.0
      %401 = vmatprep.subr.mxu0 0.0
      %402 = vmatpush2.msra.mxu0 0.0
      %403 = vmatprep.subr.mxu0 0.0
      %404 = vmatpush2.msra.mxu0 0.0
      %405 = vmatprep.subr.mxu0 0.0
      %406 = vmatpush2.msra.mxu0 0.0
      %407 = vmatprep.subr.mxu0 0.0
      %408 = vmatpush2.msra.mxu0 0.0
      %409 = vmatprep.subr.mxu0 0.0
      %410 = vmatpush2.msra.mxu0 0.0
      %411 = vmatprep.subr.mxu0 0.0
      %412 = vmatpush2.msra.mxu0 0.0
      %413 = vmatprep.subr.mxu0 0.0
      %414 = vmatpush2.msra.mxu0 0.0
      %415 = vmatprep.subr.mxu0 0.0
      %416 = vmatpush2.msra.mxu0 0.0
      %417 = vmatprep.subr.mxu0 0.0
      %418 = vmatpush2.msra.mxu0 0.0
      %419 = vmatprep.subr.mxu0 0.0
      %420 = vmatpush2.msra.mxu0 0.0
      %421 = vmatprep.subr.mxu0 0.0
      %422 = vmatpush2.msra.mxu0 0.0
      %423 = vmatprep.subr.mxu0 0.0
      %424 = vmatpush2.msra.mxu0 0.0
      %425 = vmatprep.subr.mxu0 0.0
      %426 = vmatpush2.msra.mxu0 0.0
      %427 = vmatprep.mubr.f32.mxu0 0.0
      %v428 = vand.u32 %v343, 4294901760
      %v429 = vsub.f32 %v343, %v428
      %v430 = vand.u32 %v429, 4294901760
      %v431 = vsub.f32 %v429, %v430
      %v432 = vand.u32 %v431, 4294901760
      %433 = vmatmul.mubr.f32.gmra.mxu0 %v432
      %v434 = vpop.f32.mrf.mxu0
      %v435 = vadd.f32 0.0, %v434
      %v436 = vpop.f32.mrf.mxu0
      %v437 = vadd.f32 0.0, %v436
      %438 = vdwg.mxu0
      %439 = vmatprep.subr.mxu0 0.0
      %440 = vmatpush1.msra.mxu0 0.0
      %441 = vmatprep.subr.mxu0 0.0
      %442 = vmatpush1.msra.mxu0 0.0
      %443 = vmatprep.subr.mxu0 0.0
      %444 = vmatpush1.msra.mxu0 0.0
      %445 = vmatprep.subr.mxu0 0.0
      %446 = vmatpush1.msra.mxu0 0.0
      %447 = vmatprep.subr.mxu0 0.0
      %448 = vmatpush1.msra.mxu0 0.0
      %449 = vmatprep.subr.mxu0 0.0
      %450 = vmatpush1.msra.mxu0 0.0
      %451 = vmatprep.subr.mxu0 0.0
      %452 = vmatpush1.msra.mxu0 0.0
      %v453 = vand.u32 %v340, 4294901760
      %v454 = vsub.f32 %v340, %v453
      %v455 = vand.u32 %v454, 4294901760
      %v456 = vsub.f32 %v454, %v455
      %v457 = vand.u32 %v456, 4294901760
      %458 = vmatprep.subr.mxu0 %v457
      %v459 = vand.u32 %v339, 4294901760
      %v460 = vsub.f32 %v339, %v459
      %v461 = vand.u32 %v460, 4294901760
      %v462 = vsub.f32 %v460, %v461
      %v463 = vand.u32 %v462, 4294901760
      %464 = vmatpush1.msra.mxu0 %v463
      %v465 = vand.u32 %v323, 4294901760
      %v466 = vsub.f32 %v323, %v465
      %v467 = vand.u32 %v466, 4294901760
      %v468 = vsub.f32 %v466, %v467
      %v469 = vand.u32 %v468, 4294901760
      %470 = vmatprep.subr.mxu0 %v469
      %v471 = vand.u32 %v322, 4294901760
      %v472 = vsub.f32 %v322, %v471
      %v473 = vand.u32 %v472, 4294901760
      %v474 = vsub.f32 %v472, %v473
      %v475 = vand.u32 %v474, 4294901760
      %476 = vmatpush1.msra.mxu0 %v475
      %v477 = vand.u32 %v306, 4294901760
      %v478 = vsub.f32 %v306, %v477
      %v479 = vand.u32 %v478, 4294901760
      %v480 = vsub.f32 %v478, %v479
      %v481 = vand.u32 %v480, 4294901760
      %482 = vmatprep.subr.mxu0 %v481
      %v483 = vand.u32 %v305, 4294901760
      %v484 = vsub.f32 %v305, %v483
      %v485 = vand.u32 %v484, 4294901760
      %v486 = vsub.f32 %v484, %v485
      %v487 = vand.u32 %v486, 4294901760
      %488 = vmatpush1.msra.mxu0 %v487
      %v489 = vand.u32 %v289, 4294901760
      %v490 = vsub.f32 %v289, %v489
      %v491 = vand.u32 %v490, 4294901760
      %v492 = vsub.f32 %v490, %v491
      %v493 = vand.u32 %v492, 4294901760
      %494 = vmatprep.subr.mxu0 %v493
      %v495 = vand.u32 %v288, 4294901760
      %v496 = vsub.f32 %v288, %v495
      %v497 = vand.u32 %v496, 4294901760
      %v498 = vsub.f32 %v496, %v497
      %v499 = vand.u32 %v498, 4294901760
      %500 = vmatpush1.msra.mxu0 %v499
      %v501 = vand.u32 %v199, 4294901760
      %v502 = vsub.f32 %v199, %v501
      %v503 = vand.u32 %v502, 4294901760
      %v504 = vsub.f32 %v502, %v503
      %v505 = vand.u32 %v504, 4294901760
      %506 = vmatprep.subr.mxu0 %v505
      %v507 = vand.u32 %v198, 4294901760
      %v508 = vsub.f32 %v198, %v507
      %v509 = vand.u32 %v508, 4294901760
      %v510 = vsub.f32 %v508, %v509
      %v511 = vand.u32 %v510, 4294901760
      %512 = vmatpush1.msra.mxu0 %v511
      %v513 = vand.u32 %v272, 4294901760
      %v514 = vsub.f32 %v272, %v513
      %v515 = vand.u32 %v514, 4294901760
      %v516 = vsub.f32 %v514, %v515
      %v517 = vand.u32 %v516, 4294901760
      %518 = vmatprep.subr.mxu0 %v517
      %v519 = vand.u32 %v271, 4294901760
      %v520 = vsub.f32 %v271, %v519
      %v521 = vand.u32 %v520, 4294901760
      %v522 = vsub.f32 %v520, %v521
      %v523 = vand.u32 %v522, 4294901760
      %524 = vmatpush1.msra.mxu0 %v523
      %v525 = vand.u32 %v255, 4294901760
      %v526 = vsub.f32 %v255, %v525
      %v527 = vand.u32 %v526, 4294901760
      %v528 = vsub.f32 %v526, %v527
      %v529 = vand.u32 %v528, 4294901760
      %530 = vmatprep.subr.mxu0 %v529
      %v531 = vand.u32 %v254, 4294901760
      %v532 = vsub.f32 %v254, %v531
      %v533 = vand.u32 %v532, 4294901760
      %v534 = vsub.f32 %v532, %v533
      %v535 = vand.u32 %v534, 4294901760
      %536 = vmatpush1.msra.mxu0 %v535
      %v537 = vand.u32 %v238, 4294901760
      %v538 = vsub.f32 %v238, %v537
      %v539 = vand.u32 %v538, 4294901760
      %v540 = vsub.f32 %v538, %v539
      %v541 = vand.u32 %v540, 4294901760
      %542 = vmatprep.subr.mxu0 %v541
      %v543 = vand.u32 %v237, 4294901760
      %v544 = vsub.f32 %v237, %v543
      %v545 = vand.u32 %v544, 4294901760
      %v546 = vsub.f32 %v544, %v545
      %v547 = vand.u32 %v546, 4294901760
      %548 = vmatpush1.msra.mxu0 %v547
      %v549 = vand.u32 %v221, 4294901760
      %v550 = vsub.f32 %v221, %v549
      %v551 = vand.u32 %v550, 4294901760
      %v552 = vsub.f32 %v550, %v551
      %v553 = vand.u32 %v552, 4294901760
      %554 = vmatprep.subr.mxu0 %v553
      %v555 = vand.u32 %v220, 4294901760
      %v556 = vsub.f32 %v220, %v555
      %v557 = vand.u32 %v556, 4294901760
      %v558 = vsub.f32 %v556, %v557
      %v559 = vand.u32 %v558, 4294901760
      %560 = vmatpush1.msra.mxu0 %v559
      %561 = vmatprep.subr.mxu0 0.0
      %562 = vmatpush2.msra.mxu0 0.0
      %563 = vmatprep.subr.mxu0 0.0
      %564 = vmatpush2.msra.mxu0 0.0
      %565 = vmatprep.subr.mxu0 0.0
      %566 = vmatpush2.msra.mxu0 0.0
      %567 = vmatprep.subr.mxu0 0.0
      %568 = vmatpush2.msra.mxu0 0.0
      %569 = vmatprep.subr.mxu0 0.0
      %570 = vmatpush2.msra.mxu0 0.0
      %571 = vmatprep.subr.mxu0 0.0
      %572 = vmatpush2.msra.mxu0 0.0
      %573 = vmatprep.subr.mxu0 0.0
      %574 = vmatpush2.msra.mxu0 0.0
      %575 = vmatprep.subr.mxu0 0.0
      %576 = vmatpush2.msra.mxu0 0.0
      %577 = vmatprep.subr.mxu0 0.0
      %578 = vmatpush2.msra.mxu0 0.0
      %579 = vmatprep.subr.mxu0 0.0
      %580 = vmatpush2.msra.mxu0 0.0
      %581 = vmatprep.subr.mxu0 0.0
      %582 = vmatpush2.msra.mxu0 0.0
      %583 = vmatprep.subr.mxu0 0.0
      %584 = vmatpush2.msra.mxu0 0.0
      %585 = vmatprep.subr.mxu0 0.0
      %586 = vmatpush2.msra.mxu0 0.0
      %587 = vmatprep.subr.mxu0 0.0
      %588 = vmatpush2.msra.mxu0 0.0
      %589 = vmatprep.subr.mxu0 0.0
      %590 = vmatpush2.msra.mxu0 0.0
      %591 = vmatprep.subr.mxu0 0.0
      %592 = vmatpush2.msra.mxu0 0.0
      %593 = vmatprep.mubr.f32.mxu0 0.0
      %v594 = vand.u32 %v343, 4294901760
      %595 = vmatmul.mubr.f32.gmra.mxu0 %v594
      %v596 = vpop.f32.mrf.mxu0
      %v597 = vadd.f32 %v435, %v596
      %v598 = vpop.f32.mrf.mxu0
      %v599 = vadd.f32 %v437, %v598
      %600 = vdwg.mxu0
      %601 = vmatprep.subr.mxu0 0.0
      %602 = vmatpush1.msra.mxu0 0.0
      %603 = vmatprep.subr.mxu0 0.0
      %604 = vmatpush1.msra.mxu0 0.0
      %605 = vmatprep.subr.mxu0 0.0
      %606 = vmatpush1.msra.mxu0 0.0
      %607 = vmatprep.subr.mxu0 0.0
      %608 = vmatpush1.msra.mxu0 0.0
      %609 = vmatprep.subr.mxu0 0.0
      %610 = vmatpush1.msra.mxu0 0.0
      %611 = vmatprep.subr.mxu0 0.0
      %612 = vmatpush1.msra.mxu0 0.0
      %613 = vmatprep.subr.mxu0 0.0
      %614 = vmatpush1.msra.mxu0 0.0
      %v615 = vand.u32 %v340, 4294901760
      %v616 = vsub.f32 %v340, %v615
      %617 = vmatprep.subr.mxu0 %v616
      %v618 = vand.u32 %v339, 4294901760
      %v619 = vsub.f32 %v339, %v618
      %620 = vmatpush1.msra.mxu0 %v619
      %v621 = vand.u32 %v323, 4294901760
      %v622 = vsub.f32 %v323, %v621
      %623 = vmatprep.subr.mxu0 %v622
      %v624 = vand.u32 %v322, 4294901760
      %v625 = vsub.f32 %v322, %v624
      %626 = vmatpush1.msra.mxu0 %v625
      %v627 = vand.u32 %v306, 4294901760
      %v628 = vsub.f32 %v306, %v627
      %629 = vmatprep.subr.mxu0 %v628
      %v630 = vand.u32 %v305, 4294901760
      %v631 = vsub.f32 %v305, %v630
      %632 = vmatpush1.msra.mxu0 %v631
      %v633 = vand.u32 %v289, 4294901760
      %v634 = vsub.f32 %v289, %v633
      %635 = vmatprep.subr.mxu0 %v634
      %v636 = vand.u32 %v288, 4294901760
      %v637 = vsub.f32 %v288, %v636
      %638 = vmatpush1.msra.mxu0 %v637
      %v639 = vand.u32 %v199, 4294901760
      %v640 = vsub.f32 %v199, %v639
      %641 = vmatprep.subr.mxu0 %v640
      %v642 = vand.u32 %v198, 4294901760
      %v643 = vsub.f32 %v198, %v642
      %644 = vmatpush1.msra.mxu0 %v643
      %v645 = vand.u32 %v272, 4294901760
      %v646 = vsub.f32 %v272, %v645
      %647 = vmatprep.subr.mxu0 %v646
      %v648 = vand.u32 %v271, 4294901760
      %v649 = vsub.f32 %v271, %v648
      %650 = vmatpush1.msra.mxu0 %v649
      %v651 = vand.u32 %v255, 4294901760
      %v652 = vsub.f32 %v255, %v651
      %653 = vmatprep.subr.mxu0 %v652
      %v654 = vand.u32 %v254, 4294901760
      %v655 = vsub.f32 %v254, %v654
      %656 = vmatpush1.msra.mxu0 %v655
      %v657 = vand.u32 %v238, 4294901760
      %v658 = vsub.f32 %v238, %v657
      %659 = vmatprep.subr.mxu0 %v658
      %v660 = vand.u32 %v237, 4294901760
      %v661 = vsub.f32 %v237, %v660
      %662 = vmatpush1.msra.mxu0 %v661
      %v663 = vand.u32 %v221, 4294901760
      %v664 = vsub.f32 %v221, %v663
      %665 = vmatprep.subr.mxu0 %v664
      %v666 = vand.u32 %v220, 4294901760
      %v667 = vsub.f32 %v220, %v666
      %668 = vmatpush1.msra.mxu0 %v667
      %669 = vmatprep.subr.mxu0 0.0
      %670 = vmatpush2.msra.mxu0 0.0
      %671 = vmatprep.subr.mxu0 0.0
      %672 = vmatpush2.msra.mxu0 0.0
      %673 = vmatprep.subr.mxu0 0.0
      %674 = vmatpush2.msra.mxu0 0.0
      %675 = vmatprep.subr.mxu0 0.0
      %676 = vmatpush2.msra.mxu0 0.0
      %677 = vmatprep.subr.mxu0 0.0
      %678 = vmatpush2.msra.mxu0 0.0
      %679 = vmatprep.subr.mxu0 0.0
      %680 = vmatpush2.msra.mxu0 0.0
      %681 = vmatprep.subr.mxu0 0.0
      %682 = vmatpush2.msra.mxu0 0.0
      %683 = vmatprep.subr.mxu0 0.0
      %684 = vmatpush2.msra.mxu0 0.0
      %685 = vmatprep.subr.mxu0 0.0
      %686 = vmatpush2.msra.mxu0 0.0
      %687 = vmatprep.subr.mxu0 0.0
      %688 = vmatpush2.msra.mxu0 0.0
      %689 = vmatprep.subr.mxu0 0.0
      %690 = vmatpush2.msra.mxu0 0.0
      %691 = vmatprep.subr.mxu0 0.0
      %692 = vmatpush2.msra.mxu0 0.0
      %693 = vmatprep.subr.mxu0 0.0
      %694 = vmatpush2.msra.mxu0 0.0
      %695 = vmatprep.subr.mxu0 0.0
      %696 = vmatpush2.msra.mxu0 0.0
      %697 = vmatprep.subr.mxu0 0.0
      %698 = vmatpush2.msra.mxu0 0.0
      %699 = vmatprep.subr.mxu0 0.0
      %700 = vmatpush2.msra.mxu0 0.0
      %701 = vmatprep.mubr.f32.mxu0 0.0
      %v702 = vand.u32 %v343, 4294901760
      %v703 = vsub.f32 %v343, %v702
      %704 = vmatmul.mubr.f32.gmra.mxu0 %v703
      %v705 = vpop.f32.mrf.mxu0
      %v706 = vadd.f32 %v597, %v705
      %v707 = vpop.f32.mrf.mxu0
      %v708 = vadd.f32 %v599, %v707
      %709 = vdwg.mxu0
      %710 = vmatprep.subr.mxu0 0.0
      %711 = vmatpush1.msra.mxu0 0.0
      %712 = vmatprep.subr.mxu0 0.0
      %713 = vmatpush1.msra.mxu0 0.0
      %714 = vmatprep.subr.mxu0 0.0
      %715 = vmatpush1.msra.mxu0 0.0
      %716 = vmatprep.subr.mxu0 0.0
      %717 = vmatpush1.msra.mxu0 0.0
      %718 = vmatprep.subr.mxu0 0.0
      %719 = vmatpush1.msra.mxu0 0.0
      %720 = vmatprep.subr.mxu0 0.0
      %721 = vmatpush1.msra.mxu0 0.0
      %722 = vmatprep.subr.mxu0 0.0
      %723 = vmatpush1.msra.mxu0 0.0
      %v724 = vand.u32 %v340, 4294901760
      %725 = vmatprep.subr.mxu0 %v724
      %v726 = vand.u32 %v339, 4294901760
      %727 = vmatpush1.msra.mxu0 %v726
      %v728 = vand.u32 %v323, 4294901760
      %729 = vmatprep.subr.mxu0 %v728
      %v730 = vand.u32 %v322, 4294901760
      %731 = vmatpush1.msra.mxu0 %v730
      %v732 = vand.u32 %v306, 4294901760
      %733 = vmatprep.subr.mxu0 %v732
      %v734 = vand.u32 %v305, 4294901760
      %735 = vmatpush1.msra.mxu0 %v734
      %v736 = vand.u32 %v289, 4294901760
      %737 = vmatprep.subr.mxu0 %v736
      %v738 = vand.u32 %v288, 4294901760
      %739 = vmatpush1.msra.mxu0 %v738
      %v740 = vand.u32 %v199, 4294901760
      %741 = vmatprep.subr.mxu0 %v740
      %v742 = vand.u32 %v198, 4294901760
      %743 = vmatpush1.msra.mxu0 %v742
      %v744 = vand.u32 %v272, 4294901760
      %745 = vmatprep.subr.mxu0 %v744
      %v746 = vand.u32 %v271, 4294901760
      %747 = vmatpush1.msra.mxu0 %v746
      %v748 = vand.u32 %v255, 4294901760
      %749 = vmatprep.subr.mxu0 %v748
      %v750 = vand.u32 %v254, 4294901760
      %751 = vmatpush1.msra.mxu0 %v750
      %v752 = vand.u32 %v238, 4294901760
      %753 = vmatprep.subr.mxu0 %v752
      %v754 = vand.u32 %v237, 4294901760
      %755 = vmatpush1.msra.mxu0 %v754
      %v756 = vand.u32 %v221, 4294901760
      %757 = vmatprep.subr.mxu0 %v756
      %v758 = vand.u32 %v220, 4294901760
      %759 = vmatpush1.msra.mxu0 %v758
      %760 = vmatprep.subr.mxu0 0.0
      %761 = vmatpush2.msra.mxu0 0.0
      %762 = vmatprep.subr.mxu0 0.0
      %763 = vmatpush2.msra.mxu0 0.0
      %764 = vmatprep.subr.mxu0 0.0
      %765 = vmatpush2.msra.mxu0 0.0
      %766 = vmatprep.subr.mxu0 0.0
      %767 = vmatpush2.msra.mxu0 0.0
      %768 = vmatprep.subr.mxu0 0.0
      %769 = vmatpush2.msra.mxu0 0.0
      %770 = vmatprep.subr.mxu0 0.0
      %771 = vmatpush2.msra.mxu0 0.0
      %772 = vmatprep.subr.mxu0 0.0
      %773 = vmatpush2.msra.mxu0 0.0
      %774 = vmatprep.subr.mxu0 0.0
      %775 = vmatpush2.msra.mxu0 0.0
      %776 = vmatprep.subr.mxu0 0.0
      %777 = vmatpush2.msra.mxu0 0.0
      %778 = vmatprep.subr.mxu0 0.0
      %779 = vmatpush2.msra.mxu0 0.0
      %780 = vmatprep.subr.mxu0 0.0
      %781 = vmatpush2.msra.mxu0 0.0
      %782 = vmatprep.subr.mxu0 0.0
      %783 = vmatpush2.msra.mxu0 0.0
      %784 = vmatprep.subr.mxu0 0.0
      %785 = vmatpush2.msra.mxu0 0.0
      %786 = vmatprep.subr.mxu0 0.0
      %787 = vmatpush2.msra.mxu0 0.0
      %788 = vmatprep.subr.mxu0 0.0
      %789 = vmatpush2.msra.mxu0 0.0
      %790 = vmatprep.subr.mxu0 0.0
      %791 = vmatpush2.msra.mxu0 0.0
      %792 = vmatprep.mubr.f32.mxu0 0.0
      %v793 = vand.u32 %v343, 4294901760
      %v794 = vsub.f32 %v343, %v793
      %v795 = vand.u32 %v794, 4294901760
      %796 = vmatmul.mubr.f32.gmra.mxu0 %v795
      %v797 = vpop.f32.mrf.mxu0
      %v798 = vadd.f32 %v706, %v797
      %v799 = vpop.f32.mrf.mxu0
      %v800 = vadd.f32 %v708, %v799
      %801 = vdwg.mxu0
      %802 = vmatprep.subr.mxu0 0.0
      %803 = vmatpush1.msra.mxu0 0.0
      %804 = vmatprep.subr.mxu0 0.0
      %805 = vmatpush1.msra.mxu0 0.0
      %806 = vmatprep.subr.mxu0 0.0
      %807 = vmatpush1.msra.mxu0 0.0
      %808 = vmatprep.subr.mxu0 0.0
      %809 = vmatpush1.msra.mxu0 0.0
      %810 = vmatprep.subr.mxu0 0.0
      %811 = vmatpush1.msra.mxu0 0.0
      %812 = vmatprep.subr.mxu0 0.0
      %813 = vmatpush1.msra.mxu0 0.0
      %814 = vmatprep.subr.mxu0 0.0
      %815 = vmatpush1.msra.mxu0 0.0
      %v816 = vand.u32 %v340, 4294901760
      %v817 = vsub.f32 %v340, %v816
      %v818 = vand.u32 %v817, 4294901760
      %819 = vmatprep.subr.mxu0 %v818
      %v820 = vand.u32 %v339, 4294901760
      %v821 = vsub.f32 %v339, %v820
      %v822 = vand.u32 %v821, 4294901760
      %823 = vmatpush1.msra.mxu0 %v822
      %v824 = vand.u32 %v323, 4294901760
      %v825 = vsub.f32 %v323, %v824
      %v826 = vand.u32 %v825, 4294901760
      %827 = vmatprep.subr.mxu0 %v826
      %v828 = vand.u32 %v322, 4294901760
      %v829 = vsub.f32 %v322, %v828
      %v830 = vand.u32 %v829, 4294901760
      %831 = vmatpush1.msra.mxu0 %v830
      %v832 = vand.u32 %v306, 4294901760
      %v833 = vsub.f32 %v306, %v832
      %v834 = vand.u32 %v833, 4294901760
      %835 = vmatprep.subr.mxu0 %v834
      %v836 = vand.u32 %v305, 4294901760
      %v837 = vsub.f32 %v305, %v836
      %v838 = vand.u32 %v837, 4294901760
      %839 = vmatpush1.msra.mxu0 %v838
      %v840 = vand.u32 %v289, 4294901760
      %v841 = vsub.f32 %v289, %v840
      %v842 = vand.u32 %v841, 4294901760
      %843 = vmatprep.subr.mxu0 %v842
      %v844 = vand.u32 %v288, 4294901760
      %v845 = vsub.f32 %v288, %v844
      %v846 = vand.u32 %v845, 4294901760
      %847 = vmatpush1.msra.mxu0 %v846
      %v848 = vand.u32 %v199, 4294901760
      %v849 = vsub.f32 %v199, %v848
      %v850 = vand.u32 %v849, 4294901760
      %851 = vmatprep.subr.mxu0 %v850
      %v852 = vand.u32 %v198, 4294901760
      %v853 = vsub.f32 %v198, %v852
      %v854 = vand.u32 %v853, 4294901760
      %855 = vmatpush1.msra.mxu0 %v854
      %v856 = vand.u32 %v272, 4294901760
      %v857 = vsub.f32 %v272, %v856
      %v858 = vand.u32 %v857, 4294901760
      %859 = vmatprep.subr.mxu0 %v858
      %v860 = vand.u32 %v271, 4294901760
      %v861 = vsub.f32 %v271, %v860
      %v862 = vand.u32 %v861, 4294901760
      %863 = vmatpush1.msra.mxu0 %v862
      %v864 = vand.u32 %v255, 4294901760
      %v865 = vsub.f32 %v255, %v864
      %v866 = vand.u32 %v865, 4294901760
      %867 = vmatprep.subr.mxu0 %v866
      %v868 = vand.u32 %v254, 4294901760
      %v869 = vsub.f32 %v254, %v868
      %v870 = vand.u32 %v869, 4294901760
      %871 = vmatpush1.msra.mxu0 %v870
      %v872 = vand.u32 %v238, 4294901760
      %v873 = vsub.f32 %v238, %v872
      %v874 = vand.u32 %v873, 4294901760
      %875 = vmatprep.subr.mxu0 %v874
      %v876 = vand.u32 %v237, 4294901760
      %v877 = vsub.f32 %v237, %v876
      %v878 = vand.u32 %v877, 4294901760
      %879 = vmatpush1.msra.mxu0 %v878
      %v880 = vand.u32 %v221, 4294901760
      %v881 = vsub.f32 %v221, %v880
      %v882 = vand.u32 %v881, 4294901760
      %883 = vmatprep.subr.mxu0 %v882
      %v884 = vand.u32 %v220, 4294901760
      %v885 = vsub.f32 %v220, %v884
      %v886 = vand.u32 %v885, 4294901760
      %887 = vmatpush1.msra.mxu0 %v886
      %888 = vmatprep.subr.mxu0 0.0
      %889 = vmatpush2.msra.mxu0 0.0
      %890 = vmatprep.subr.mxu0 0.0
      %891 = vmatpush2.msra.mxu0 0.0
      %892 = vmatprep.subr.mxu0 0.0
      %893 = vmatpush2.msra.mxu0 0.0
      %894 = vmatprep.subr.mxu0 0.0
      %895 = vmatpush2.msra.mxu0 0.0
      %896 = vmatprep.subr.mxu0 0.0
      %897 = vmatpush2.msra.mxu0 0.0
      %898 = vmatprep.subr.mxu0 0.0
      %899 = vmatpush2.msra.mxu0 0.0
      %900 = vmatprep.subr.mxu0 0.0
      %901 = vmatpush2.msra.mxu0 0.0
      %902 = vmatprep.subr.mxu0 0.0
      %903 = vmatpush2.msra.mxu0 0.0
      %904 = vmatprep.subr.mxu0 0.0
      %905 = vmatpush2.msra.mxu0 0.0
      %906 = vmatprep.subr.mxu0 0.0
      %907 = vmatpush2.msra.mxu0 0.0
      %908 = vmatprep.subr.mxu0 0.0
      %909 = vmatpush2.msra.mxu0 0.0
      %910 = vmatprep.subr.mxu0 0.0
      %911 = vmatpush2.msra.mxu0 0.0
      %912 = vmatprep.subr.mxu0 0.0
      %913 = vmatpush2.msra.mxu0 0.0
      %914 = vmatprep.subr.mxu0 0.0
      %915 = vmatpush2.msra.mxu0 0.0
      %916 = vmatprep.subr.mxu0 0.0
      %917 = vmatpush2.msra.mxu0 0.0
      %918 = vmatprep.subr.mxu0 0.0
      %919 = vmatpush2.msra.mxu0 0.0
      %920 = vmatprep.mubr.f32.mxu0 0.0
      %v921 = vand.u32 %v343, 4294901760
      %922 = vmatmul.mubr.f32.gmra.mxu0 %v921
      %v923 = vpop.f32.mrf.mxu0
      %v924 = vadd.f32 %v798, %v923
      %v925 = vpop.f32.mrf.mxu0
      %v926 = vadd.f32 %v800, %v925
      %927 = vdwg.mxu0
      %928 = vmatprep.subr.mxu0 0.0
      %929 = vmatpush1.msra.mxu0 0.0
      %930 = vmatprep.subr.mxu0 0.0
      %931 = vmatpush1.msra.mxu0 0.0
      %932 = vmatprep.subr.mxu0 0.0
      %933 = vmatpush1.msra.mxu0 0.0
      %934 = vmatprep.subr.mxu0 0.0
      %935 = vmatpush1.msra.mxu0 0.0
      %936 = vmatprep.subr.mxu0 0.0
      %937 = vmatpush1.msra.mxu0 0.0
      %938 = vmatprep.subr.mxu0 0.0
      %939 = vmatpush1.msra.mxu0 0.0
      %940 = vmatprep.subr.mxu0 0.0
      %941 = vmatpush1.msra.mxu0 0.0
      %v942 = vand.u32 %v340, 4294901760
      %943 = vmatprep.subr.mxu0 %v942
      %v944 = vand.u32 %v339, 4294901760
      %945 = vmatpush1.msra.mxu0 %v944
      %v946 = vand.u32 %v323, 4294901760
      %947 = vmatprep.subr.mxu0 %v946
      %v948 = vand.u32 %v322, 4294901760
      %949 = vmatpush1.msra.mxu0 %v948
      %v950 = vand.u32 %v306, 4294901760
      %951 = vmatprep.subr.mxu0 %v950
      %v952 = vand.u32 %v305, 4294901760
      %953 = vmatpush1.msra.mxu0 %v952
      %v954 = vand.u32 %v289, 4294901760
      %955 = vmatprep.subr.mxu0 %v954
      %v956 = vand.u32 %v288, 4294901760
      %957 = vmatpush1.msra.mxu0 %v956
      %v958 = vand.u32 %v199, 4294901760
      %959 = vmatprep.subr.mxu0 %v958
      %v960 = vand.u32 %v198, 4294901760
      %961 = vmatpush1.msra.mxu0 %v960
      %v962 = vand.u32 %v272, 4294901760
      %963 = vmatprep.subr.mxu0 %v962
      %v964 = vand.u32 %v271, 4294901760
      %965 = vmatpush1.msra.mxu0 %v964
      %v966 = vand.u32 %v255, 4294901760
      %967 = vmatprep.subr.mxu0 %v966
      %v968 = vand.u32 %v254, 4294901760
      %969 = vmatpush1.msra.mxu0 %v968
      %v970 = vand.u32 %v238, 4294901760
      %971 = vmatprep.subr.mxu0 %v970
      %v972 = vand.u32 %v237, 4294901760
      %973 = vmatpush1.msra.mxu0 %v972
      %v974 = vand.u32 %v221, 4294901760
      %975 = vmatprep.subr.mxu0 %v974
      %v976 = vand.u32 %v220, 4294901760
      %977 = vmatpush1.msra.mxu0 %v976
      %978 = vmatprep.subr.mxu0 0.0
      %979 = vmatpush2.msra.mxu0 0.0
      %980 = vmatprep.subr.mxu0 0.0
      %981 = vmatpush2.msra.mxu0 0.0
      %982 = vmatprep.subr.mxu0 0.0
      %983 = vmatpush2.msra.mxu0 0.0
      %984 = vmatprep.subr.mxu0 0.0
      %985 = vmatpush2.msra.mxu0 0.0
      %986 = vmatprep.subr.mxu0 0.0
      %987 = vmatpush2.msra.mxu0 0.0
      %988 = vmatprep.subr.mxu0 0.0
      %989 = vmatpush2.msra.mxu0 0.0
      %990 = vmatprep.subr.mxu0 0.0
      %991 = vmatpush2.msra.mxu0 0.0
      %992 = vmatprep.subr.mxu0 0.0
      %993 = vmatpush2.msra.mxu0 0.0
      %994 = vmatprep.subr.mxu0 0.0
      %995 = vmatpush2.msra.mxu0 0.0
      %996 = vmatprep.subr.mxu0 0.0
      %997 = vmatpush2.msra.mxu0 0.0
      %998 = vmatprep.subr.mxu0 0.0
      %999 = vmatpush2.msra.mxu0 0.0
      %1000 = vmatprep.subr.mxu0 0.0
      %1001 = vmatpush2.msra.mxu0 0.0
      %1002 = vmatprep.subr.mxu0 0.0
      %1003 = vmatpush2.msra.mxu0 0.0
      %1004 = vmatprep.subr.mxu0 0.0
      %1005 = vmatpush2.msra.mxu0 0.0
      %1006 = vmatprep.subr.mxu0 0.0
      %1007 = vmatpush2.msra.mxu0 0.0
      %1008 = vmatprep.subr.mxu0 0.0
      %1009 = vmatpush2.msra.mxu0 0.0
      %1010 = vmatprep.mubr.f32.mxu0 0.0
      %v1011 = vand.u32 %v343, 4294901760
      %1012 = vmatmul.mubr.f32.gmra.mxu0 %v1011
      %v1013 = vpop.f32.mrf.mxu0
      %v1014 = vadd.f32 %v924, %v1013
      %v1015 = vpop.f32.mrf.mxu0
      %v1016 = vadd.f32 %v926, %v1015
      %1017 = vdwg.mxu0
      %v1018 = vadd.f32 %v1014, %v1016
      %1019 = vadd.xlane.f32.xlu0 %v1018
      %v1020 = vpop.xlane.xlu0 %1019
      %v1021 = vmul.f32 %v1014, %v1014
      %v1022 = vmul.f32 %v1016, %v1016
      %v1023 = vadd.f32 %v1021, %v1022
      %1024 = vadd.xlane.f32.xlu0 %v1023
      %v1025 = vpop.xlane.xlu0 %1024
      %v1026 = vmul.f32 %v1020, 0.00390625
      %v1027 = vmul.f32 %v1025, 0.00390625
      %v1028 = vmul.f32 %v1026, %v1026
      %v1029 = vsub.f32 %v1027, %v1028
      %v1030 = vsub.f32 %v1014, %v1026
      %v1031 = vsub.f32 %v1016, %v1026
      %v1032 = vadd.f32 %v1029, 1e-05
      %v1033 = vrsqrt.pop %v1032
      %v1034 = vmul.f32 %v1030, %v1033
      %v1035 = vmul.f32 %v1031, %v1033
      %v1036 = vmax.f32 %v1034, 0.0
      %v1037 = vmax.f32 %v1035, 0.0
      %v1038 = vld [vmem:[%s3] sm:$0xff]
      %1039 = vrot.lane.b32.xlu0 %v1036, 17
      %v1040 = vpop.permute.xlu0 %1039
      %1041 = vrot.lane.b32.xlu0 %v1037, 17
      %v1042 = vpop.permute.xlu0 %1041
      %v1043 = vsel %vm209, %v1040, %v1042
      %v1044 = vsel %vm209, %v1042, %v1040
      %v1045 = vmul.f32 %v1044, %v215
      %v1046 = vmul.f32 %v1043, %v219
      %1047 = vrot.lane.b32.xlu0 %v1036, 16
      %v1048 = vpop.permute.xlu0 %1047
      %1049 = vrot.lane.b32.xlu0 %v1037, 16
      %v1050 = vpop.permute.xlu0 %1049
      %v1051 = vsel %vm226, %v1048, %v1050
      %v1052 = vsel %vm226, %v1050, %v1048
      %v1053 = vmul.f32 %v1052, %v232
      %v1054 = vmul.f32 %v1051, %v236
      %1055 = vrot.lane.b32.xlu0 %v1036, 15
      %v1056 = vpop.permute.xlu0 %1055
      %1057 = vrot.lane.b32.xlu0 %v1037, 15
      %v1058 = vpop.permute.xlu0 %1057
      %v1059 = vsel %vm243, %v1056, %v1058
      %v1060 = vsel %vm243, %v1058, %v1056
      %v1061 = vmul.f32 %v1060, %v249
      %v1062 = vmul.f32 %v1059, %v253
      %1063 = vrot.lane.b32.xlu0 %v1036, 1
      %v1064 = vpop.permute.xlu0 %1063
      %1065 = vrot.lane.b32.xlu0 %v1037, 1
      %v1066 = vpop.permute.xlu0 %1065
      %v1067 = vsel %vm260, %v1064, %v1066
      %v1068 = vsel %vm260, %v1066, %v1064
      %v1069 = vmul.f32 %v1068, %v266
      %v1070 = vmul.f32 %v1067, %v270
      %1071 = vrot.lane.b32.xlu0 %v1036, 127
      %v1072 = vpop.permute.xlu0 %1071
      %1073 = vrot.lane.b32.xlu0 %v1037, 127
      %v1074 = vpop.permute.xlu0 %1073
      %v1075 = vsel %vm277, %v1072, %v1074
      %v1076 = vsel %vm277, %v1074, %v1072
      %v1077 = vmul.f32 %v1075, %v283
      %v1078 = vmul.f32 %v1076, %v287
      %1079 = vrot.lane.b32.xlu0 %v1036, 113
      %v1080 = vpop.permute.xlu0 %1079
      %1081 = vrot.lane.b32.xlu0 %v1037, 113
      %v1082 = vpop.permute.xlu0 %1081
      %v1083 = vsel %vm294, %v1080, %v1082
      %v1084 = vsel %vm294, %v1082, %v1080
      %v1085 = vmul.f32 %v1083, %v300
      %v1086 = vmul.f32 %v1084, %v304
      %1087 = vrot.lane.b32.xlu0 %v1036, 112
      %v1088 = vpop.permute.xlu0 %1087
      %1089 = vrot.lane.b32.xlu0 %v1037, 112
      %v1090 = vpop.permute.xlu0 %1089
      %v1091 = vsel %vm311, %v1088, %v1090
      %v1092 = vsel %vm311, %v1090, %v1088
      %v1093 = vmul.f32 %v1091, %v317
      %v1094 = vmul.f32 %v1092, %v321
      %1095 = vrot.lane.b32.xlu0 %v1036, 111
      %v1096 = vpop.permute.xlu0 %1095
      %1097 = vrot.lane.b32.xlu0 %v1037, 111
      %v1098 = vpop.permute.xlu0 %1097
      %v1099 = vsel %vm328, %v1096, %v1098
      %v1100 = vsel %vm328, %v1098, %v1096
      %v1101 = vmul.f32 %v1099, %v334
      %v1102 = vmul.f32 %v1100, %v338
      %v1104 = vsel %vm341, %v1038, 0
      %1106 = vmatprep.subr.mxu0 0.0
      %1107 = vmatpush1.msra.mxu0 0.0
      %1108 = vmatprep.subr.mxu0 0.0
      %1109 = vmatpush1.msra.mxu0 0.0
      %1110 = vmatprep.subr.mxu0 0.0
      %1111 = vmatpush1.msra.mxu0 0.0
      %1112 = vmatprep.subr.mxu0 0.0
      %1113 = vmatpush1.msra.mxu0 0.0
      %1114 = vmatprep.subr.mxu0 0.0
      %1115 = vmatpush1.msra.mxu0 0.0
      %1116 = vmatprep.subr.mxu0 0.0
      %1117 = vmatpush1.msra.mxu0 0.0
      %1118 = vmatprep.subr.mxu0 0.0
      %1119 = vmatpush1.msra.mxu0 0.0
      %v1120 = vand.u32 %v1102, 4294901760
      %1121 = vmatprep.subr.mxu0 %v1120
      %v1122 = vand.u32 %v1101, 4294901760
      %1123 = vmatpush1.msra.mxu0 %v1122
      %v1124 = vand.u32 %v1094, 4294901760
      %1125 = vmatprep.subr.mxu0 %v1124
      %v1126 = vand.u32 %v1093, 4294901760
      %1127 = vmatpush1.msra.mxu0 %v1126
      %v1128 = vand.u32 %v1086, 4294901760
      %1129 = vmatprep.subr.mxu0 %v1128
      %v1130 = vand.u32 %v1085, 4294901760
      %1131 = vmatpush1.msra.mxu0 %v1130
      %v1132 = vand.u32 %v1078, 4294901760
      %1133 = vmatprep.subr.mxu0 %v1132
      %v1134 = vand.u32 %v1077, 4294901760
      %1135 = vmatpush1.msra.mxu0 %v1134
      %v1136 = vand.u32 %v1037, 4294901760
      %1137 = vmatprep.subr.mxu0 %v1136
      %v1138 = vand.u32 %v1036, 4294901760
      %1139 = vmatpush1.msra.mxu0 %v1138
      %v1140 = vand.u32 %v1070, 4294901760
      %1141 = vmatprep.subr.mxu0 %v1140
      %v1142 = vand.u32 %v1069, 4294901760
      %1143 = vmatpush1.msra.mxu0 %v1142
      %v1144 = vand.u32 %v1062, 4294901760
      %1145 = vmatprep.subr.mxu0 %v1144
      %v1146 = vand.u32 %v1061, 4294901760
      %1147 = vmatpush1.msra.mxu0 %v1146
      %v1148 = vand.u32 %v1054, 4294901760
      %1149 = vmatprep.subr.mxu0 %v1148
      %v1150 = vand.u32 %v1053, 4294901760
      %1151 = vmatpush1.msra.mxu0 %v1150
      %v1152 = vand.u32 %v1046, 4294901760
      %1153 = vmatprep.subr.mxu0 %v1152
      %v1154 = vand.u32 %v1045, 4294901760
      %1155 = vmatpush1.msra.mxu0 %v1154
      %1156 = vmatprep.subr.mxu0 0.0
      %1157 = vmatpush2.msra.mxu0 0.0
      %1158 = vmatprep.subr.mxu0 0.0
      %1159 = vmatpush2.msra.mxu0 0.0
      %1160 = vmatprep.subr.mxu0 0.0
      %1161 = vmatpush2.msra.mxu0 0.0
      %1162 = vmatprep.subr.mxu0 0.0
      %1163 = vmatpush2.msra.mxu0 0.0
      %1164 = vmatprep.subr.mxu0 0.0
      %1165 = vmatpush2.msra.mxu0 0.0
      %1166 = vmatprep.subr.mxu0 0.0
      %1167 = vmatpush2.msra.mxu0 0.0
      %1168 = vmatprep.subr.mxu0 0.0
      %1169 = vmatpush2.msra.mxu0 0.0
      %1170 = vmatprep.subr.mxu0 0.0
      %1171 = vmatpush2.msra.mxu0 0.0
      %1172 = vmatprep.subr.mxu0 0.0
      %1173 = vmatpush2.msra.mxu0 0.0
      %1174 = vmatprep.subr.mxu0 0.0
      %1175 = vmatpush2.msra.mxu0 0.0
      %1176 = vmatprep.subr.mxu0 0.0
      %1177 = vmatpush2.msra.mxu0 0.0
      %1178 = vmatprep.subr.mxu0 0.0
      %1179 = vmatpush2.msra.mxu0 0.0
      %1180 = vmatprep.subr.mxu0 0.0
      %1181 = vmatpush2.msra.mxu0 0.0
      %1182 = vmatprep.subr.mxu0 0.0
      %1183 = vmatpush2.msra.mxu0 0.0
      %1184 = vmatprep.subr.mxu0 0.0
      %1185 = vmatpush2.msra.mxu0 0.0
      %1186 = vmatprep.subr.mxu0 0.0
      %1187 = vmatpush2.msra.mxu0 0.0
      %1188 = vmatprep.mubr.f32.mxu0 0.0
      %v1189 = vand.u32 %v1104, 4294901760
      %v1190 = vsub.f32 %v1104, %v1189
      %v1191 = vand.u32 %v1190, 4294901760
      %v1192 = vsub.f32 %v1190, %v1191
      %v1193 = vand.u32 %v1192, 4294901760
      %1194 = vmatmul.mubr.f32.gmra.mxu0 %v1193
      %v1195 = vpop.f32.mrf.mxu0
      %v1196 = vadd.f32 0.0, %v1195
      %v1197 = vpop.f32.mrf.mxu0
      %v1198 = vadd.f32 0.0, %v1197
      %1199 = vdwg.mxu0
      %1200 = vmatprep.subr.mxu0 0.0
      %1201 = vmatpush1.msra.mxu0 0.0
      %1202 = vmatprep.subr.mxu0 0.0
      %1203 = vmatpush1.msra.mxu0 0.0
      %1204 = vmatprep.subr.mxu0 0.0
      %1205 = vmatpush1.msra.mxu0 0.0
      %1206 = vmatprep.subr.mxu0 0.0
      %1207 = vmatpush1.msra.mxu0 0.0
      %1208 = vmatprep.subr.mxu0 0.0
      %1209 = vmatpush1.msra.mxu0 0.0
      %1210 = vmatprep.subr.mxu0 0.0
      %1211 = vmatpush1.msra.mxu0 0.0
      %1212 = vmatprep.subr.mxu0 0.0
      %1213 = vmatpush1.msra.mxu0 0.0
      %v1214 = vand.u32 %v1102, 4294901760
      %v1215 = vsub.f32 %v1102, %v1214
      %v1216 = vand.u32 %v1215, 4294901760
      %v1217 = vsub.f32 %v1215, %v1216
      %v1218 = vand.u32 %v1217, 4294901760
      %1219 = vmatprep.subr.mxu0 %v1218
      %v1220 = vand.u32 %v1101, 4294901760
      %v1221 = vsub.f32 %v1101, %v1220
      %v1222 = vand.u32 %v1221, 4294901760
      %v1223 = vsub.f32 %v1221, %v1222
      %v1224 = vand.u32 %v1223, 4294901760
      %1225 = vmatpush1.msra.mxu0 %v1224
      %v1226 = vand.u32 %v1094, 4294901760
      %v1227 = vsub.f32 %v1094, %v1226
      %v1228 = vand.u32 %v1227, 4294901760
      %v1229 = vsub.f32 %v1227, %v1228
      %v1230 = vand.u32 %v1229, 4294901760
      %1231 = vmatprep.subr.mxu0 %v1230
      %v1232 = vand.u32 %v1093, 4294901760
      %v1233 = vsub.f32 %v1093, %v1232
      %v1234 = vand.u32 %v1233, 4294901760
      %v1235 = vsub.f32 %v1233, %v1234
      %v1236 = vand.u32 %v1235, 4294901760
      %1237 = vmatpush1.msra.mxu0 %v1236
      %v1238 = vand.u32 %v1086, 4294901760
      %v1239 = vsub.f32 %v1086, %v1238
      %v1240 = vand.u32 %v1239, 4294901760
      %v1241 = vsub.f32 %v1239, %v1240
      %v1242 = vand.u32 %v1241, 4294901760
      %1243 = vmatprep.subr.mxu0 %v1242
      %v1244 = vand.u32 %v1085, 4294901760
      %v1245 = vsub.f32 %v1085, %v1244
      %v1246 = vand.u32 %v1245, 4294901760
      %v1247 = vsub.f32 %v1245, %v1246
      %v1248 = vand.u32 %v1247, 4294901760
      %1249 = vmatpush1.msra.mxu0 %v1248
      %v1250 = vand.u32 %v1078, 4294901760
      %v1251 = vsub.f32 %v1078, %v1250
      %v1252 = vand.u32 %v1251, 4294901760
      %v1253 = vsub.f32 %v1251, %v1252
      %v1254 = vand.u32 %v1253, 4294901760
      %1255 = vmatprep.subr.mxu0 %v1254
      %v1256 = vand.u32 %v1077, 4294901760
      %v1257 = vsub.f32 %v1077, %v1256
      %v1258 = vand.u32 %v1257, 4294901760
      %v1259 = vsub.f32 %v1257, %v1258
      %v1260 = vand.u32 %v1259, 4294901760
      %1261 = vmatpush1.msra.mxu0 %v1260
      %v1262 = vand.u32 %v1037, 4294901760
      %v1263 = vsub.f32 %v1037, %v1262
      %v1264 = vand.u32 %v1263, 4294901760
      %v1265 = vsub.f32 %v1263, %v1264
      %v1266 = vand.u32 %v1265, 4294901760
      %1267 = vmatprep.subr.mxu0 %v1266
      %v1268 = vand.u32 %v1036, 4294901760
      %v1269 = vsub.f32 %v1036, %v1268
      %v1270 = vand.u32 %v1269, 4294901760
      %v1271 = vsub.f32 %v1269, %v1270
      %v1272 = vand.u32 %v1271, 4294901760
      %1273 = vmatpush1.msra.mxu0 %v1272
      %v1274 = vand.u32 %v1070, 4294901760
      %v1275 = vsub.f32 %v1070, %v1274
      %v1276 = vand.u32 %v1275, 4294901760
      %v1277 = vsub.f32 %v1275, %v1276
      %v1278 = vand.u32 %v1277, 4294901760
      %1279 = vmatprep.subr.mxu0 %v1278
      %v1280 = vand.u32 %v1069, 4294901760
      %v1281 = vsub.f32 %v1069, %v1280
      %v1282 = vand.u32 %v1281, 4294901760
      %v1283 = vsub.f32 %v1281, %v1282
      %v1284 = vand.u32 %v1283, 4294901760
      %1285 = vmatpush1.msra.mxu0 %v1284
      %v1286 = vand.u32 %v1062, 4294901760
      %v1287 = vsub.f32 %v1062, %v1286
      %v1288 = vand.u32 %v1287, 4294901760
      %v1289 = vsub.f32 %v1287, %v1288
      %v1290 = vand.u32 %v1289, 4294901760
      %1291 = vmatprep.subr.mxu0 %v1290
      %v1292 = vand.u32 %v1061, 4294901760
      %v1293 = vsub.f32 %v1061, %v1292
      %v1294 = vand.u32 %v1293, 4294901760
      %v1295 = vsub.f32 %v1293, %v1294
      %v1296 = vand.u32 %v1295, 4294901760
      %1297 = vmatpush1.msra.mxu0 %v1296
      %v1298 = vand.u32 %v1054, 4294901760
      %v1299 = vsub.f32 %v1054, %v1298
      %v1300 = vand.u32 %v1299, 4294901760
      %v1301 = vsub.f32 %v1299, %v1300
      %v1302 = vand.u32 %v1301, 4294901760
      %1303 = vmatprep.subr.mxu0 %v1302
      %v1304 = vand.u32 %v1053, 4294901760
      %v1305 = vsub.f32 %v1053, %v1304
      %v1306 = vand.u32 %v1305, 4294901760
      %v1307 = vsub.f32 %v1305, %v1306
      %v1308 = vand.u32 %v1307, 4294901760
      %1309 = vmatpush1.msra.mxu0 %v1308
      %v1310 = vand.u32 %v1046, 4294901760
      %v1311 = vsub.f32 %v1046, %v1310
      %v1312 = vand.u32 %v1311, 4294901760
      %v1313 = vsub.f32 %v1311, %v1312
      %v1314 = vand.u32 %v1313, 4294901760
      %1315 = vmatprep.subr.mxu0 %v1314
      %v1316 = vand.u32 %v1045, 4294901760
      %v1317 = vsub.f32 %v1045, %v1316
      %v1318 = vand.u32 %v1317, 4294901760
      %v1319 = vsub.f32 %v1317, %v1318
      %v1320 = vand.u32 %v1319, 4294901760
      %1321 = vmatpush1.msra.mxu0 %v1320
      %1322 = vmatprep.subr.mxu0 0.0
      %1323 = vmatpush2.msra.mxu0 0.0
      %1324 = vmatprep.subr.mxu0 0.0
      %1325 = vmatpush2.msra.mxu0 0.0
      %1326 = vmatprep.subr.mxu0 0.0
      %1327 = vmatpush2.msra.mxu0 0.0
      %1328 = vmatprep.subr.mxu0 0.0
      %1329 = vmatpush2.msra.mxu0 0.0
      %1330 = vmatprep.subr.mxu0 0.0
      %1331 = vmatpush2.msra.mxu0 0.0
      %1332 = vmatprep.subr.mxu0 0.0
      %1333 = vmatpush2.msra.mxu0 0.0
      %1334 = vmatprep.subr.mxu0 0.0
      %1335 = vmatpush2.msra.mxu0 0.0
      %1336 = vmatprep.subr.mxu0 0.0
      %1337 = vmatpush2.msra.mxu0 0.0
      %1338 = vmatprep.subr.mxu0 0.0
      %1339 = vmatpush2.msra.mxu0 0.0
      %1340 = vmatprep.subr.mxu0 0.0
      %1341 = vmatpush2.msra.mxu0 0.0
      %1342 = vmatprep.subr.mxu0 0.0
      %1343 = vmatpush2.msra.mxu0 0.0
      %1344 = vmatprep.subr.mxu0 0.0
      %1345 = vmatpush2.msra.mxu0 0.0
      %1346 = vmatprep.subr.mxu0 0.0
      %1347 = vmatpush2.msra.mxu0 0.0
      %1348 = vmatprep.subr.mxu0 0.0
      %1349 = vmatpush2.msra.mxu0 0.0
      %1350 = vmatprep.subr.mxu0 0.0
      %1351 = vmatpush2.msra.mxu0 0.0
      %1352 = vmatprep.subr.mxu0 0.0
      %1353 = vmatpush2.msra.mxu0 0.0
      %1354 = vmatprep.mubr.f32.mxu0 0.0
      %v1355 = vand.u32 %v1104, 4294901760
      %1356 = vmatmul.mubr.f32.gmra.mxu0 %v1355
      %v1357 = vpop.f32.mrf.mxu0
      %v1358 = vadd.f32 %v1196, %v1357
      %v1359 = vpop.f32.mrf.mxu0
      %v1360 = vadd.f32 %v1198, %v1359
      %1361 = vdwg.mxu0
      %1362 = vmatprep.subr.mxu0 0.0
      %1363 = vmatpush1.msra.mxu0 0.0
      %1364 = vmatprep.subr.mxu0 0.0
      %1365 = vmatpush1.msra.mxu0 0.0
      %1366 = vmatprep.subr.mxu0 0.0
      %1367 = vmatpush1.msra.mxu0 0.0
      %1368 = vmatprep.subr.mxu0 0.0
      %1369 = vmatpush1.msra.mxu0 0.0
      %1370 = vmatprep.subr.mxu0 0.0
      %1371 = vmatpush1.msra.mxu0 0.0
      %1372 = vmatprep.subr.mxu0 0.0
      %1373 = vmatpush1.msra.mxu0 0.0
      %1374 = vmatprep.subr.mxu0 0.0
      %1375 = vmatpush1.msra.mxu0 0.0
      %v1376 = vand.u32 %v1102, 4294901760
      %v1377 = vsub.f32 %v1102, %v1376
      %1378 = vmatprep.subr.mxu0 %v1377
      %v1379 = vand.u32 %v1101, 4294901760
      %v1380 = vsub.f32 %v1101, %v1379
      %1381 = vmatpush1.msra.mxu0 %v1380
      %v1382 = vand.u32 %v1094, 4294901760
      %v1383 = vsub.f32 %v1094, %v1382
      %1384 = vmatprep.subr.mxu0 %v1383
      %v1385 = vand.u32 %v1093, 4294901760
      %v1386 = vsub.f32 %v1093, %v1385
      %1387 = vmatpush1.msra.mxu0 %v1386
      %v1388 = vand.u32 %v1086, 4294901760
      %v1389 = vsub.f32 %v1086, %v1388
      %1390 = vmatprep.subr.mxu0 %v1389
      %v1391 = vand.u32 %v1085, 4294901760
      %v1392 = vsub.f32 %v1085, %v1391
      %1393 = vmatpush1.msra.mxu0 %v1392
      %v1394 = vand.u32 %v1078, 4294901760
      %v1395 = vsub.f32 %v1078, %v1394
      %1396 = vmatprep.subr.mxu0 %v1395
      %v1397 = vand.u32 %v1077, 4294901760
      %v1398 = vsub.f32 %v1077, %v1397
      %1399 = vmatpush1.msra.mxu0 %v1398
      %v1400 = vand.u32 %v1037, 4294901760
      %v1401 = vsub.f32 %v1037, %v1400
      %1402 = vmatprep.subr.mxu0 %v1401
      %v1403 = vand.u32 %v1036, 4294901760
      %v1404 = vsub.f32 %v1036, %v1403
      %1405 = vmatpush1.msra.mxu0 %v1404
      %v1406 = vand.u32 %v1070, 4294901760
      %v1407 = vsub.f32 %v1070, %v1406
      %1408 = vmatprep.subr.mxu0 %v1407
      %v1409 = vand.u32 %v1069, 4294901760
      %v1410 = vsub.f32 %v1069, %v1409
      %1411 = vmatpush1.msra.mxu0 %v1410
      %v1412 = vand.u32 %v1062, 4294901760
      %v1413 = vsub.f32 %v1062, %v1412
      %1414 = vmatprep.subr.mxu0 %v1413
      %v1415 = vand.u32 %v1061, 4294901760
      %v1416 = vsub.f32 %v1061, %v1415
      %1417 = vmatpush1.msra.mxu0 %v1416
      %v1418 = vand.u32 %v1054, 4294901760
      %v1419 = vsub.f32 %v1054, %v1418
      %1420 = vmatprep.subr.mxu0 %v1419
      %v1421 = vand.u32 %v1053, 4294901760
      %v1422 = vsub.f32 %v1053, %v1421
      %1423 = vmatpush1.msra.mxu0 %v1422
      %v1424 = vand.u32 %v1046, 4294901760
      %v1425 = vsub.f32 %v1046, %v1424
      %1426 = vmatprep.subr.mxu0 %v1425
      %v1427 = vand.u32 %v1045, 4294901760
      %v1428 = vsub.f32 %v1045, %v1427
      %1429 = vmatpush1.msra.mxu0 %v1428
      %1430 = vmatprep.subr.mxu0 0.0
      %1431 = vmatpush2.msra.mxu0 0.0
      %1432 = vmatprep.subr.mxu0 0.0
      %1433 = vmatpush2.msra.mxu0 0.0
      %1434 = vmatprep.subr.mxu0 0.0
      %1435 = vmatpush2.msra.mxu0 0.0
      %1436 = vmatprep.subr.mxu0 0.0
      %1437 = vmatpush2.msra.mxu0 0.0
      %1438 = vmatprep.subr.mxu0 0.0
      %1439 = vmatpush2.msra.mxu0 0.0
      %1440 = vmatprep.subr.mxu0 0.0
      %1441 = vmatpush2.msra.mxu0 0.0
      %1442 = vmatprep.subr.mxu0 0.0
      %1443 = vmatpush2.msra.mxu0 0.0
      %1444 = vmatprep.subr.mxu0 0.0
      %1445 = vmatpush2.msra.mxu0 0.0
      %1446 = vmatprep.subr.mxu0 0.0
      %1447 = vmatpush2.msra.mxu0 0.0
      %1448 = vmatprep.subr.mxu0 0.0
      %1449 = vmatpush2.msra.mxu0 0.0
      %1450 = vmatprep.subr.mxu0 0.0
      %1451 = vmatpush2.msra.mxu0 0.0
      %1452 = vmatprep.subr.mxu0 0.0
      %1453 = vmatpush2.msra.mxu0 0.0
      %1454 = vmatprep.subr.mxu0 0.0
      %1455 = vmatpush2.msra.mxu0 0.0
      %1456 = vmatprep.subr.mxu0 0.0
      %1457 = vmatpush2.msra.mxu0 0.0
      %1458 = vmatprep.subr.mxu0 0.0
      %1459 = vmatpush2.msra.mxu0 0.0
      %1460 = vmatprep.subr.mxu0 0.0
      %1461 = vmatpush2.msra.mxu0 0.0
      %1462 = vmatprep.mubr.f32.mxu0 0.0
      %v1463 = vand.u32 %v1104, 4294901760
      %v1464 = vsub.f32 %v1104, %v1463
      %1465 = vmatmul.mubr.f32.gmra.mxu0 %v1464
      %v1466 = vpop.f32.mrf.mxu0
      %v1467 = vadd.f32 %v1358, %v1466
      %v1468 = vpop.f32.mrf.mxu0
      %v1469 = vadd.f32 %v1360, %v1468
      %1470 = vdwg.mxu0
      %1471 = vmatprep.subr.mxu0 0.0
      %1472 = vmatpush1.msra.mxu0 0.0
      %1473 = vmatprep.subr.mxu0 0.0
      %1474 = vmatpush1.msra.mxu0 0.0
      %1475 = vmatprep.subr.mxu0 0.0
      %1476 = vmatpush1.msra.mxu0 0.0
      %1477 = vmatprep.subr.mxu0 0.0
      %1478 = vmatpush1.msra.mxu0 0.0
      %1479 = vmatprep.subr.mxu0 0.0
      %1480 = vmatpush1.msra.mxu0 0.0
      %1481 = vmatprep.subr.mxu0 0.0
      %1482 = vmatpush1.msra.mxu0 0.0
      %1483 = vmatprep.subr.mxu0 0.0
      %1484 = vmatpush1.msra.mxu0 0.0
      %v1485 = vand.u32 %v1102, 4294901760
      %1486 = vmatprep.subr.mxu0 %v1485
      %v1487 = vand.u32 %v1101, 4294901760
      %1488 = vmatpush1.msra.mxu0 %v1487
      %v1489 = vand.u32 %v1094, 4294901760
      %1490 = vmatprep.subr.mxu0 %v1489
      %v1491 = vand.u32 %v1093, 4294901760
      %1492 = vmatpush1.msra.mxu0 %v1491
      %v1493 = vand.u32 %v1086, 4294901760
      %1494 = vmatprep.subr.mxu0 %v1493
      %v1495 = vand.u32 %v1085, 4294901760
      %1496 = vmatpush1.msra.mxu0 %v1495
      %v1497 = vand.u32 %v1078, 4294901760
      %1498 = vmatprep.subr.mxu0 %v1497
      %v1499 = vand.u32 %v1077, 4294901760
      %1500 = vmatpush1.msra.mxu0 %v1499
      %v1501 = vand.u32 %v1037, 4294901760
      %1502 = vmatprep.subr.mxu0 %v1501
      %v1503 = vand.u32 %v1036, 4294901760
      %1504 = vmatpush1.msra.mxu0 %v1503
      %v1505 = vand.u32 %v1070, 4294901760
      %1506 = vmatprep.subr.mxu0 %v1505
      %v1507 = vand.u32 %v1069, 4294901760
      %1508 = vmatpush1.msra.mxu0 %v1507
      %v1509 = vand.u32 %v1062, 4294901760
      %1510 = vmatprep.subr.mxu0 %v1509
      %v1511 = vand.u32 %v1061, 4294901760
      %1512 = vmatpush1.msra.mxu0 %v1511
      %v1513 = vand.u32 %v1054, 4294901760
      %1514 = vmatprep.subr.mxu0 %v1513
      %v1515 = vand.u32 %v1053, 4294901760
      %1516 = vmatpush1.msra.mxu0 %v1515
      %v1517 = vand.u32 %v1046, 4294901760
      %1518 = vmatprep.subr.mxu0 %v1517
      %v1519 = vand.u32 %v1045, 4294901760
      %1520 = vmatpush1.msra.mxu0 %v1519
      %1521 = vmatprep.subr.mxu0 0.0
      %1522 = vmatpush2.msra.mxu0 0.0
      %1523 = vmatprep.subr.mxu0 0.0
      %1524 = vmatpush2.msra.mxu0 0.0
      %1525 = vmatprep.subr.mxu0 0.0
      %1526 = vmatpush2.msra.mxu0 0.0
      %1527 = vmatprep.subr.mxu0 0.0
      %1528 = vmatpush2.msra.mxu0 0.0
      %1529 = vmatprep.subr.mxu0 0.0
      %1530 = vmatpush2.msra.mxu0 0.0
      %1531 = vmatprep.subr.mxu0 0.0
      %1532 = vmatpush2.msra.mxu0 0.0
      %1533 = vmatprep.subr.mxu0 0.0
      %1534 = vmatpush2.msra.mxu0 0.0
      %1535 = vmatprep.subr.mxu0 0.0
      %1536 = vmatpush2.msra.mxu0 0.0
      %1537 = vmatprep.subr.mxu0 0.0
      %1538 = vmatpush2.msra.mxu0 0.0
      %1539 = vmatprep.subr.mxu0 0.0
      %1540 = vmatpush2.msra.mxu0 0.0
      %1541 = vmatprep.subr.mxu0 0.0
      %1542 = vmatpush2.msra.mxu0 0.0
      %1543 = vmatprep.subr.mxu0 0.0
      %1544 = vmatpush2.msra.mxu0 0.0
      %1545 = vmatprep.subr.mxu0 0.0
      %1546 = vmatpush2.msra.mxu0 0.0
      %1547 = vmatprep.subr.mxu0 0.0
      %1548 = vmatpush2.msra.mxu0 0.0
      %1549 = vmatprep.subr.mxu0 0.0
      %1550 = vmatpush2.msra.mxu0 0.0
      %1551 = vmatprep.subr.mxu0 0.0
      %1552 = vmatpush2.msra.mxu0 0.0
      %1553 = vmatprep.mubr.f32.mxu0 0.0
      %v1554 = vand.u32 %v1104, 4294901760
      %v1555 = vsub.f32 %v1104, %v1554
      %v1556 = vand.u32 %v1555, 4294901760
      %1557 = vmatmul.mubr.f32.gmra.mxu0 %v1556
      %v1558 = vpop.f32.mrf.mxu0
      %v1559 = vadd.f32 %v1467, %v1558
      %v1560 = vpop.f32.mrf.mxu0
      %v1561 = vadd.f32 %v1469, %v1560
      %1562 = vdwg.mxu0
      %1563 = vmatprep.subr.mxu0 0.0
      %1564 = vmatpush1.msra.mxu0 0.0
      %1565 = vmatprep.subr.mxu0 0.0
      %1566 = vmatpush1.msra.mxu0 0.0
      %1567 = vmatprep.subr.mxu0 0.0
      %1568 = vmatpush1.msra.mxu0 0.0
      %1569 = vmatprep.subr.mxu0 0.0
      %1570 = vmatpush1.msra.mxu0 0.0
      %1571 = vmatprep.subr.mxu0 0.0
      %1572 = vmatpush1.msra.mxu0 0.0
      %1573 = vmatprep.subr.mxu0 0.0
      %1574 = vmatpush1.msra.mxu0 0.0
      %1575 = vmatprep.subr.mxu0 0.0
      %1576 = vmatpush1.msra.mxu0 0.0
      %v1577 = vand.u32 %v1102, 4294901760
      %v1578 = vsub.f32 %v1102, %v1577
      %v1579 = vand.u32 %v1578, 4294901760
      %1580 = vmatprep.subr.mxu0 %v1579
      %v1581 = vand.u32 %v1101, 4294901760
      %v1582 = vsub.f32 %v1101, %v1581
      %v1583 = vand.u32 %v1582, 4294901760
      %1584 = vmatpush1.msra.mxu0 %v1583
      %v1585 = vand.u32 %v1094, 4294901760
      %v1586 = vsub.f32 %v1094, %v1585
      %v1587 = vand.u32 %v1586, 4294901760
      %1588 = vmatprep.subr.mxu0 %v1587
      %v1589 = vand.u32 %v1093, 4294901760
      %v1590 = vsub.f32 %v1093, %v1589
      %v1591 = vand.u32 %v1590, 4294901760
      %1592 = vmatpush1.msra.mxu0 %v1591
      %v1593 = vand.u32 %v1086, 4294901760
      %v1594 = vsub.f32 %v1086, %v1593
      %v1595 = vand.u32 %v1594, 4294901760
      %1596 = vmatprep.subr.mxu0 %v1595
      %v1597 = vand.u32 %v1085, 4294901760
      %v1598 = vsub.f32 %v1085, %v1597
      %v1599 = vand.u32 %v1598, 4294901760
      %1600 = vmatpush1.msra.mxu0 %v1599
      %v1601 = vand.u32 %v1078, 4294901760
      %v1602 = vsub.f32 %v1078, %v1601
      %v1603 = vand.u32 %v1602, 4294901760
      %1604 = vmatprep.subr.mxu0 %v1603
      %v1605 = vand.u32 %v1077, 4294901760
      %v1606 = vsub.f32 %v1077, %v1605
      %v1607 = vand.u32 %v1606, 4294901760
      %1608 = vmatpush1.msra.mxu0 %v1607
      %v1609 = vand.u32 %v1037, 4294901760
      %v1610 = vsub.f32 %v1037, %v1609
      %v1611 = vand.u32 %v1610, 4294901760
      %1612 = vmatprep.subr.mxu0 %v1611
      %v1613 = vand.u32 %v1036, 4294901760
      %v1614 = vsub.f32 %v1036, %v1613
      %v1615 = vand.u32 %v1614, 4294901760
      %1616 = vmatpush1.msra.mxu0 %v1615
      %v1617 = vand.u32 %v1070, 4294901760
      %v1618 = vsub.f32 %v1070, %v1617
      %v1619 = vand.u32 %v1618, 4294901760
      %1620 = vmatprep.subr.mxu0 %v1619
      %v1621 = vand.u32 %v1069, 4294901760
      %v1622 = vsub.f32 %v1069, %v1621
      %v1623 = vand.u32 %v1622, 4294901760
      %1624 = vmatpush1.msra.mxu0 %v1623
      %v1625 = vand.u32 %v1062, 4294901760
      %v1626 = vsub.f32 %v1062, %v1625
      %v1627 = vand.u32 %v1626, 4294901760
      %1628 = vmatprep.subr.mxu0 %v1627
      %v1629 = vand.u32 %v1061, 4294901760
      %v1630 = vsub.f32 %v1061, %v1629
      %v1631 = vand.u32 %v1630, 4294901760
      %1632 = vmatpush1.msra.mxu0 %v1631
      %v1633 = vand.u32 %v1054, 4294901760
      %v1634 = vsub.f32 %v1054, %v1633
      %v1635 = vand.u32 %v1634, 4294901760
      %1636 = vmatprep.subr.mxu0 %v1635
      %v1637 = vand.u32 %v1053, 4294901760
      %v1638 = vsub.f32 %v1053, %v1637
      %v1639 = vand.u32 %v1638, 4294901760
      %1640 = vmatpush1.msra.mxu0 %v1639
      %v1641 = vand.u32 %v1046, 4294901760
      %v1642 = vsub.f32 %v1046, %v1641
      %v1643 = vand.u32 %v1642, 4294901760
      %1644 = vmatprep.subr.mxu0 %v1643
      %v1645 = vand.u32 %v1045, 4294901760
      %v1646 = vsub.f32 %v1045, %v1645
      %v1647 = vand.u32 %v1646, 4294901760
      %1648 = vmatpush1.msra.mxu0 %v1647
      %1649 = vmatprep.subr.mxu0 0.0
      %1650 = vmatpush2.msra.mxu0 0.0
      %1651 = vmatprep.subr.mxu0 0.0
      %1652 = vmatpush2.msra.mxu0 0.0
      %1653 = vmatprep.subr.mxu0 0.0
      %1654 = vmatpush2.msra.mxu0 0.0
      %1655 = vmatprep.subr.mxu0 0.0
      %1656 = vmatpush2.msra.mxu0 0.0
      %1657 = vmatprep.subr.mxu0 0.0
      %1658 = vmatpush2.msra.mxu0 0.0
      %1659 = vmatprep.subr.mxu0 0.0
      %1660 = vmatpush2.msra.mxu0 0.0
      %1661 = vmatprep.subr.mxu0 0.0
      %1662 = vmatpush2.msra.mxu0 0.0
      %1663 = vmatprep.subr.mxu0 0.0
      %1664 = vmatpush2.msra.mxu0 0.0
      %1665 = vmatprep.subr.mxu0 0.0
      %1666 = vmatpush2.msra.mxu0 0.0
      %1667 = vmatprep.subr.mxu0 0.0
      %1668 = vmatpush2.msra.mxu0 0.0
      %1669 = vmatprep.subr.mxu0 0.0
      %1670 = vmatpush2.msra.mxu0 0.0
      %1671 = vmatprep.subr.mxu0 0.0
      %1672 = vmatpush2.msra.mxu0 0.0
      %1673 = vmatprep.subr.mxu0 0.0
      %1674 = vmatpush2.msra.mxu0 0.0
      %1675 = vmatprep.subr.mxu0 0.0
      %1676 = vmatpush2.msra.mxu0 0.0
      %1677 = vmatprep.subr.mxu0 0.0
      %1678 = vmatpush2.msra.mxu0 0.0
      %1679 = vmatprep.subr.mxu0 0.0
      %1680 = vmatpush2.msra.mxu0 0.0
      %1681 = vmatprep.mubr.f32.mxu0 0.0
      %v1682 = vand.u32 %v1104, 4294901760
      %1683 = vmatmul.mubr.f32.gmra.mxu0 %v1682
      %v1684 = vpop.f32.mrf.mxu0
      %v1685 = vadd.f32 %v1559, %v1684
      %v1686 = vpop.f32.mrf.mxu0
      %v1687 = vadd.f32 %v1561, %v1686
      %1688 = vdwg.mxu0
      %1689 = vmatprep.subr.mxu0 0.0
      %1690 = vmatpush1.msra.mxu0 0.0
      %1691 = vmatprep.subr.mxu0 0.0
      %1692 = vmatpush1.msra.mxu0 0.0
      %1693 = vmatprep.subr.mxu0 0.0
      %1694 = vmatpush1.msra.mxu0 0.0
      %1695 = vmatprep.subr.mxu0 0.0
      %1696 = vmatpush1.msra.mxu0 0.0
      %1697 = vmatprep.subr.mxu0 0.0
      %1698 = vmatpush1.msra.mxu0 0.0
      %1699 = vmatprep.subr.mxu0 0.0
      %1700 = vmatpush1.msra.mxu0 0.0
      %1701 = vmatprep.subr.mxu0 0.0
      %1702 = vmatpush1.msra.mxu0 0.0
      %v1703 = vand.u32 %v1102, 4294901760
      %1704 = vmatprep.subr.mxu0 %v1703
      %v1705 = vand.u32 %v1101, 4294901760
      %1706 = vmatpush1.msra.mxu0 %v1705
      %v1707 = vand.u32 %v1094, 4294901760
      %1708 = vmatprep.subr.mxu0 %v1707
      %v1709 = vand.u32 %v1093, 4294901760
      %1710 = vmatpush1.msra.mxu0 %v1709
      %v1711 = vand.u32 %v1086, 4294901760
      %1712 = vmatprep.subr.mxu0 %v1711
      %v1713 = vand.u32 %v1085, 4294901760
      %1714 = vmatpush1.msra.mxu0 %v1713
      %v1715 = vand.u32 %v1078, 4294901760
      %1716 = vmatprep.subr.mxu0 %v1715
      %v1717 = vand.u32 %v1077, 4294901760
      %1718 = vmatpush1.msra.mxu0 %v1717
      %v1719 = vand.u32 %v1037, 4294901760
      %1720 = vmatprep.subr.mxu0 %v1719
      %v1721 = vand.u32 %v1036, 4294901760
      %1722 = vmatpush1.msra.mxu0 %v1721
      %v1723 = vand.u32 %v1070, 4294901760
      %1724 = vmatprep.subr.mxu0 %v1723
      %v1725 = vand.u32 %v1069, 4294901760
      %1726 = vmatpush1.msra.mxu0 %v1725
      %v1727 = vand.u32 %v1062, 4294901760
      %1728 = vmatprep.subr.mxu0 %v1727
      %v1729 = vand.u32 %v1061, 4294901760
      %1730 = vmatpush1.msra.mxu0 %v1729
      %v1731 = vand.u32 %v1054, 4294901760
      %1732 = vmatprep.subr.mxu0 %v1731
      %v1733 = vand.u32 %v1053, 4294901760
      %1734 = vmatpush1.msra.mxu0 %v1733
      %v1735 = vand.u32 %v1046, 4294901760
      %1736 = vmatprep.subr.mxu0 %v1735
      %v1737 = vand.u32 %v1045, 4294901760
      %1738 = vmatpush1.msra.mxu0 %v1737
      %1739 = vmatprep.subr.mxu0 0.0
      %1740 = vmatpush2.msra.mxu0 0.0
      %1741 = vmatprep.subr.mxu0 0.0
      %1742 = vmatpush2.msra.mxu0 0.0
      %1743 = vmatprep.subr.mxu0 0.0
      %1744 = vmatpush2.msra.mxu0 0.0
      %1745 = vmatprep.subr.mxu0 0.0
      %1746 = vmatpush2.msra.mxu0 0.0
      %1747 = vmatprep.subr.mxu0 0.0
      %1748 = vmatpush2.msra.mxu0 0.0
      %1749 = vmatprep.subr.mxu0 0.0
      %1750 = vmatpush2.msra.mxu0 0.0
      %1751 = vmatprep.subr.mxu0 0.0
      %1752 = vmatpush2.msra.mxu0 0.0
      %1753 = vmatprep.subr.mxu0 0.0
      %1754 = vmatpush2.msra.mxu0 0.0
      %1755 = vmatprep.subr.mxu0 0.0
      %1756 = vmatpush2.msra.mxu0 0.0
      %1757 = vmatprep.subr.mxu0 0.0
      %1758 = vmatpush2.msra.mxu0 0.0
      %1759 = vmatprep.subr.mxu0 0.0
      %1760 = vmatpush2.msra.mxu0 0.0
      %1761 = vmatprep.subr.mxu0 0.0
      %1762 = vmatpush2.msra.mxu0 0.0
      %1763 = vmatprep.subr.mxu0 0.0
      %1764 = vmatpush2.msra.mxu0 0.0
      %1765 = vmatprep.subr.mxu0 0.0
      %1766 = vmatpush2.msra.mxu0 0.0
      %1767 = vmatprep.subr.mxu0 0.0
      %1768 = vmatpush2.msra.mxu0 0.0
      %1769 = vmatprep.subr.mxu0 0.0
      %1770 = vmatpush2.msra.mxu0 0.0
      %1771 = vmatprep.mubr.f32.mxu0 0.0
      %v1772 = vand.u32 %v1104, 4294901760
      %1773 = vmatmul.mubr.f32.gmra.mxu0 %v1772
      %v1774 = vpop.f32.mrf.mxu0
      %v1775 = vadd.f32 %v1685, %v1774
      %v1776 = vpop.f32.mrf.mxu0
      %v1777 = vadd.f32 %v1687, %v1776
      %1778 = vdwg.mxu0
      %v1779 = vadd.f32 %v1775, %v1777
      %1780 = vadd.xlane.f32.xlu0 %v1779
      %v1781 = vpop.xlane.xlu0 %1780
      %v1782 = vmul.f32 %v1775, %v1775
      %v1783 = vmul.f32 %v1777, %v1777
      %v1784 = vadd.f32 %v1782, %v1783
      %1785 = vadd.xlane.f32.xlu0 %v1784
      %v1786 = vpop.xlane.xlu0 %1785
      %v1787 = vmul.f32 %v1781, 0.00390625
      %v1788 = vmul.f32 %v1786, 0.00390625
      %v1789 = vmul.f32 %v1787, %v1787
      %v1790 = vsub.f32 %v1788, %v1789
      %v1791 = vsub.f32 %v1775, %v1787
      %v1792 = vsub.f32 %v1777, %v1787
      %v1793 = vadd.f32 %v1790, 1e-05
      %v1794 = vrsqrt.pop %v1793
      %v1795 = vmul.f32 %v1791, %v1794
      %v1796 = vmul.f32 %v1792, %v1794
      %v1797 = vadd.f32 %v198, %v1795
      %v1798 = vadd.f32 %v199, %v1796
      %v1801 = vcombine.low %v1797, %v1798
      %1803 = vst [vmem:[%s197] sm:$0xff] %v1801
      %p1804 = scmp.lt.s32.totalorder %s15, 1
      %s1805 = scalar_select %p1804, %s15, 1
      %s1806 = smul.addr %s1805, 2
      %s1807 = smul.addr %s1806, 4
      %s1808 = scalar_lea.vmem %s4, %s1807
      // Predicated region
      $region37: #{residual_block.1} parent=35 // pred_check
        %p1809 = pneg %p122
      $region38: #{residual_block.1} parent=35 // pred_check_branch
        %1811 = sbr.rel (%p1809) target = $region40
      $region39: #{residual_block.1} parent=35 // pred_region
        _
      $region40: #{residual_block.1} parent=35 // pred_fallthru
        _
    $region36: #{residual_block.1} parent=5 // pred_fallthru
      _
    %p1812 = scmp.le.s32.totalorder 2, %s10
    // Predicated region
    $region41: #{residual_block.1} parent=5 // pred_check
      %p1813 = pneg %p1812
    $region42: #{residual_block.1} parent=5 // pred_check_branch
      %1815 = sbr.rel (%p1813) target = $region44
    $region43: #{residual_block.1} parent=5 // pred_region
      %s1816 = ssub.s32 %s10, 2
      // Predicated region
      $region45: #{residual_block.1} parent=43 // pred_check
        %p1817 = pneg %p128
      $region46: #{residual_block.1} parent=43 // pred_check_branch
        %1819 = sbr.rel (%p1817) target = $region48
      $region47: #{residual_block.1} parent=43 // pred_region
        %p1820 = scmp.lt.s32.totalorder %s16, 1
        %s1821 = scalar_select %p1820, %s16, 1
        %s1822 = smul.addr %s1821, 2
        %s1823 = smul.addr %s1822, 4
        %s1824 = scalar_lea.vmem %s4, %s1823
      $region48: #{residual_block.1} parent=43 // pred_fallthru
        _
    $region44: #{residual_block.1} parent=5 // pred_fallthru
      _
  $region6: #{residual_block.1} parent=0 // loop_footer
    %s14 = sadd.s32 1, %s10
  $region7: #{residual_block.1} parent=0 // loop_footer_branch
    %9 = sbr.rel target = $region3
  $region8: #{residual_block.1} parent=0 // loop_exit
    _

</llo_original>
